<compile_context>
chip_gen: v5e
topology: v5e:2x2
jax: 0.10.0
libtpu: 0.0.40
codegen_flags: <defaults>
</compile_context>

<pallas_src>
import functools

import jax
import jax.numpy as jnp
from jax import lax
from jax.experimental import pallas as pl
from jax.experimental.pallas import tpu as pltpu


def _device_kind() -> str:
    try:
        return jax.devices()[0].device_kind.lower()
    except Exception:
        return ""


def _default_compute_dtype():
    # bf16 VPU exists on v6e (Trillium) and v7x; older generations (v4/v5e)
    # fall back to f32 compute, which is always correct.
    kind = _device_kind()
    if any(tag in kind for tag in ("v6", "trillium", "v7")):
        return jnp.bfloat16
    return jnp.float32


def _default_min_tiles() -> int:
    # v7x has 2 TensorCores per chip; keep >= 2 grid tiles so the "parallel"
    # grid axis can shard across both.  Single-TC parts don't need this.
    return 2 if "v7" in _device_kind() else 1


def _round_up(v: int, m: int) -> int:
    return ((v + m - 1) // m) * m


def _mlp_kernel(x_ref, w1_ref, b1_ref, w2_ref, b2_ref, w3_ref, b3_ref, o_ref,
                *, chunk: int):
    """One batch tile: x_ref [in, Bt] (batch on the lane axis) -> o_ref [out, Bt]."""
    cd = w1_ref.dtype                      # compute dtype (f32 or bf16)
    use_mxu = cd == jnp.bfloat16           # MXU layer-2 only on the bf16 path

    # Weights / biases are tiny; load once per grid step (they stay
    # VMEM-resident across steps via the constant-index BlockSpec).
    w1 = w1_ref[...]                       # [16, in]
    b1 = b1_ref[...].astype(cd)            # [16, 1]
    w2 = w2_ref[...]                       # [16, 16]
    b2 = b2_ref[...]                       # [16, 1] f32 (added onto f32 MXU acc)
    w3 = w3_ref[...]                       # [mag, 16]
    b3 = b3_ref[...].astype(cd)            # [mag, 1]

    def vpu_dense(w, b, h):
        # out[o, :] = sum_k w[o, k] * h[k, :] + b[o]
        # Unrolled VPU broadcast-FMAs (overlaps with the layer-2 MXU pushes).
        acc = w[:, 0:1] * h[0:1, :] + b
        for k in range(1, w.shape[1]):
            acc = acc + w[:, k:k + 1] * h[k:k + 1, :]
        return acc

    n_chunks = x_ref.shape[1] // chunk

    def body(c, carry):
        col = pl.multiple_of(c * chunk, chunk)
        x = x_ref[:, pl.ds(col, chunk)].astype(cd)            # [in,  chunk]
        h1 = jnp.maximum(vpu_dense(w1, b1, x), 0)             # [16,  chunk]
        if use_mxu:
            # 16x16 contraction on the otherwise-idle MXU, f32 accumulation.
            h2 = jnp.dot(w2, h1, preferred_element_type=jnp.float32) + b2
        else:
            # Pure-f32 VPU path (v5e has no bf16 VPU; keeps f32 bit-tight).
            h2 = vpu_dense(w2, b2, h1)
        h2 = jnp.maximum(h2, 0.0).astype(cd)                  # [16,  chunk]
        out = vpu_dense(w3, b3, h2)                           # [mag, chunk]
        o_ref[:, pl.ds(col, chunk)] = out.astype(o_ref.dtype)
        return carry

    # Fully unrolled: chunk intermediates stay in vregs (working set << 64
    # vregs) and the LLO scheduler can interleave VPU / MXU work across chunks.
    lax.fori_loop(0, n_chunks, body, 0, unroll=True)


@functools.partial(jax.jit, static_argnames=("block_b", "chunk", "compute_dtype"))
def mlp_forward_t(xt, params, *, block_b=8192, chunk=512, compute_dtype=None):
    """Feature-major forward: xt [input_count, B] -> [mag_count, B].

    Preferred entry point: avoids the [B,feat] <-> [feat,B] transposes entirely.
    """
    assert chunk % 128 == 0, "chunk must be a multiple of the 128-wide lane axis"
    assert block_b % chunk == 0, "block_b must be a whole number of chunks"
    in_f, B = xt.shape
    mag = params["w3"].shape[0]

    cd = _default_compute_dtype() if compute_dtype is None else jnp.dtype(compute_dtype)
    min_tiles = _default_min_tiles()

    # Adaptive tile: never bigger than requested, never smaller than one chunk,
    # and (when the batch allows) at least `min_tiles` grid steps for 2-TC parts.
    eff_block = max(chunk, min(block_b, _round_up(pl.cdiv(B, min_tiles), chunk)))
    n_tiles = pl.cdiv(B, eff_block)
    padded_b = n_tiles * eff_block
    if padded_b != B:
        xt = jnp.pad(xt, ((0, 0), (0, padded_b - B)))

    # Weights cast to the compute dtype once, outside the kernel; biases stay
    # f32 so the bf16 path adds the layer-2 bias onto the f32 MXU accumulator.
    w1 = params["w1"].astype(cd); b1 = params["b1"].astype(jnp.float32)
    w2 = params["w2"].astype(cd); b2 = params["b2"].astype(jnp.float32)
    w3 = params["w3"].astype(cd); b3 = params["b3"].astype(jnp.float32)

    x_map = lambda i: (0, i)          # stream batch tiles
    w_map = lambda i: (0, 0)          # constant index -> weights stay VMEM-resident
    resident = lambda a: pl.BlockSpec(a.shape, w_map)

    # Only the double-buffered x/out tiles matter for VMEM (sublane-padded to 8
    # rows).  Set an explicit limit only if they would not fit the smallest
    # default scoped VMEM (v5e, 16 MiB).
    tile_bytes = 2 * 2 * eff_block * 8 * xt.dtype.itemsize
    vmem_limit = int(tile_bytes * 1.5) if tile_bytes > (12 << 20) else None

    out_t = pl.pallas_call(
        functools.partial(_mlp_kernel, chunk=chunk),
        out_shape=jax.ShapeDtypeStruct((mag, padded_b), xt.dtype),
        grid_spec=pltpu.PrefetchScalarGridSpec(
            num_scalar_prefetch=0,
            grid=(n_tiles,),
            in_specs=[
                pl.BlockSpec((in_f, eff_block), x_map),
                resident(w1), resident(b1),
                resident(w2), resident(b2),
                resident(w3), resident(b3),
            ],
            out_specs=pl.BlockSpec((mag, eff_block), x_map),
        ),
        compiler_params=pltpu.CompilerParams(
            dimension_semantics=("parallel",),
            vmem_limit_bytes=vmem_limit,
        ),
    )(xt, w1, b1, w2, b2, w3, b3)

    return out_t[:, :B] if padded_b != B else out_t


@functools.partial(jax.jit, static_argnames=("block_b", "chunk", "compute_dtype"))
def mlp_forward(x, params, *, block_b=8192, chunk=512, compute_dtype=None):
    """Batch-major forward: x [B, input_count] -> [B, mag_count].

    jit'd so the transpose / pad / slice fuse into one dispatch around the
    pallas_call; callers holding feature-major data should use mlp_forward_t.
    """
    out_t = mlp_forward_t(jnp.transpose(x), params, block_b=block_b,
                          chunk=chunk, compute_dtype=compute_dtype)
    return jnp.transpose(out_t)


def init_params(key, input_count, mag_count):
    """Torch-style init U(-1/sqrt(fan_in), 1/sqrt(fan_in)); W is [out, in], b is [out, 1]."""
    def linear(k, fan_in, fan_out):
        kw, kb = jax.random.split(k)
        bound = 1.0 / jnp.sqrt(jnp.float32(fan_in))
        w = jax.random.uniform(kw, (fan_out, fan_in), jnp.float32, -bound, bound)
        b = jax.random.uniform(kb, (fan_out, 1), jnp.float32, -bound, bound)
        return w, b

    k1, k2, k3 = jax.random.split(key, 3)
    w1, b1 = linear(k1, input_count, 16)
    w2, b2 = linear(k2, 16, 16)
    w3, b3 = linear(k3, 16, mag_count)
    return {"w1": w1, "b1": b1, "w2": w2, "b2": b2, "w3": w3, "b3": b3}


if __name__ == "__main__":
    key = jax.random.PRNGKey(0)
    kx, kp = jax.random.split(key)

    # State: start xyz + target xyz -> commands for 4 magnets.
    batch = 1000            # not a multiple of the tile -> exercises padding/tail
    input_count = 6
    mag_count = 4

    x = jax.random.normal(kx, (batch, input_count), jnp.float32)
    params = init_params(kp, input_count, mag_count)

    def ref_forward(xf):    # pure-JAX reference of the torch module
        h1 = jnp.maximum(xf @ params["w1"].T + params["b1"][:, 0], 0.0)
        h2 = jnp.maximum(h1 @ params["w2"].T + params["b2"][:, 0], 0.0)
        return h2 @ params["w3"].T + params["b3"][:, 0]

    ref = ref_forward(x)

    # 1) Exact f32 compute path (v5e default path; validates the math tightly).
    out_f32 = jax.block_until_ready(mlp_forward(x, params, compute_dtype=jnp.float32))
    assert out_f32.shape == (batch, mag_count)
    assert jnp.allclose(out_f32, ref, atol=1e-5, rtol=1e-5)

    # 2) Auto compute path (bf16 VPU + MXU layer-2 on v6e/v7x, f32 elsewhere).
    out_auto = jax.block_until_ready(mlp_forward(x, params))
    assert out_auto.shape == (batch, mag_count)
    assert jnp.allclose(out_auto, ref, atol=5e-2, rtol=5e-2)

    # 3) bf16 I/O (halves activation HBM traffic at scale).
    x_bf16 = x.astype(jnp.bfloat16)
    out_bf16 = jax.block_until_ready(mlp_forward(x_bf16, params))
    ref_bf16 = ref_forward(x_bf16.astype(jnp.float32))
    assert out_bf16.shape == (batch, mag_count)
    assert jnp.allclose(out_bf16.astype(jnp.float32), ref_bf16, atol=5e-2, rtol=5e-2)

    # 4) Small explicit tile -> multi-step "parallel" grid + inner chunk loop.
    out_tiled = jax.block_until_ready(
        mlp_forward(x, params, block_b=512, chunk=512, compute_dtype=jnp.float32))
    assert jnp.allclose(out_tiled, ref, atol=1e-5, rtol=1e-5)

    # TODO(synk): loss_calc / gen_training_data are training-time utilities, not
    # part of the forward pass, so they are intentionally not ported to Pallas.
    print("KERNEL_OK")
</pallas_src>

<mosaic_0001>
module attributes {stable_mosaic.version = 11 : i64} {
  func.func @_mlp_kernel(%arg0: i32, %arg1: memref<6x1024xf32, #tpu.memory_space<vmem>>, %arg2: memref<16x6xf32, #tpu.memory_space<vmem>>, %arg3: memref<16x1xf32, #tpu.memory_space<vmem>>, %arg4: memref<16x16xf32, #tpu.memory_space<vmem>>, %arg5: memref<16x1xf32, #tpu.memory_space<vmem>>, %arg6: memref<4x16xf32, #tpu.memory_space<vmem>>, %arg7: memref<4x1xf32, #tpu.memory_space<vmem>>, %arg8: memref<4x1024xf32, #tpu.memory_space<vmem>>) attributes {dimension_semantics = [#tpu.dimension_semantics<parallel>], iteration_bounds = array<i64: 1>, scalar_prefetch = 0 : i64, scratch_operands = 0 : i64, tpu.core_type = #tpu.core_type<tc>, window_params = [{transform_indices = @transform_0, window_bounds = array<i64: 6, 1024>}, {pipeline_mode = #tpu.pipeline_mode<synchronous>, transform_indices = @transform_1, window_bounds = array<i64: 16, 6>}, {pipeline_mode = #tpu.pipeline_mode<synchronous>, transform_indices = @transform_2, window_bounds = array<i64: 16, 1>}, {pipeline_mode = #tpu.pipeline_mode<synchronous>, transform_indices = @transform_3, window_bounds = array<i64: 16, 16>}, {pipeline_mode = #tpu.pipeline_mode<synchronous>, transform_indices = @transform_4, window_bounds = array<i64: 16, 1>}, {pipeline_mode = #tpu.pipeline_mode<synchronous>, transform_indices = @transform_5, window_bounds = array<i64: 4, 16>}, {pipeline_mode = #tpu.pipeline_mode<synchronous>, transform_indices = @transform_6, window_bounds = array<i64: 4, 1>}, {transform_indices = @transform_7, window_bounds = array<i64: 4, 1024>}]} {
    %c0 = arith.constant 0 : index
    %c0_0 = arith.constant 0 : index
    %0 = vector.load %arg2[%c0, %c0_0] : memref<16x6xf32, #tpu.memory_space<vmem>>, vector<16x6xf32>
    %c0_1 = arith.constant 0 : index
    %c0_2 = arith.constant 0 : index
    %1 = vector.load %arg3[%c0_1, %c0_2] : memref<16x1xf32, #tpu.memory_space<vmem>>, vector<16x1xf32>
    %c0_3 = arith.constant 0 : index
    %c0_4 = arith.constant 0 : index
    %2 = vector.load %arg4[%c0_3, %c0_4] : memref<16x16xf32, #tpu.memory_space<vmem>>, vector<16x16xf32>
    %c0_5 = arith.constant 0 : index
    %c0_6 = arith.constant 0 : index
    %3 = vector.load %arg5[%c0_5, %c0_6] : memref<16x1xf32, #tpu.memory_space<vmem>>, vector<16x1xf32>
    %c0_7 = arith.constant 0 : index
    %c0_8 = arith.constant 0 : index
    %4 = vector.load %arg6[%c0_7, %c0_8] : memref<4x16xf32, #tpu.memory_space<vmem>>, vector<4x16xf32>
    %c0_9 = arith.constant 0 : index
    %c0_10 = arith.constant 0 : index
    %5 = vector.load %arg7[%c0_9, %c0_10] : memref<4x1xf32, #tpu.memory_space<vmem>>, vector<4x1xf32>
    %c0_i32 = arith.constant 0 : i32
    %c512_i32 = arith.constant 512 : i32
    %6 = arith.muli %c0_i32, %c512_i32 : i32
    %7 = tpu.assume_multiple %6, 512 : i32
    %c0_11 = arith.constant 0 : index
    %8 = arith.index_cast %7 : i32 to index
    %9 = vector.load %arg1[%c0_11, %8] : memref<6x1024xf32, #tpu.memory_space<vmem>>, vector<6x512xf32>
    %10 = vector.extract_strided_slice %0 {offsets = [0, 0], sizes = [16, 1], strides = [1, 1]} : vector<16x6xf32> to vector<16x1xf32>
    %11 = vector.extract_strided_slice %9 {offsets = [0, 0], sizes = [1, 512], strides = [1, 1]} : vector<6x512xf32> to vector<1x512xf32>
    %12 = vector.broadcast %10 : vector<16x1xf32> to vector<16x512xf32>
    %13 = vector.broadcast %11 : vector<1x512xf32> to vector<16x512xf32>
    %14 = arith.mulf %12, %13 : vector<16x512xf32>
    %15 = vector.broadcast %1 : vector<16x1xf32> to vector<16x512xf32>
    %16 = arith.addf %14, %15 : vector<16x512xf32>
    %17 = vector.extract_strided_slice %0 {offsets = [0, 1], sizes = [16, 1], strides = [1, 1]} : vector<16x6xf32> to vector<16x1xf32>
    %18 = vector.extract_strided_slice %9 {offsets = [1, 0], sizes = [1, 512], strides = [1, 1]} : vector<6x512xf32> to vector<1x512xf32>
    %19 = vector.broadcast %17 : vector<16x1xf32> to vector<16x512xf32>
    %20 = vector.broadcast %18 : vector<1x512xf32> to vector<16x512xf32>
    %21 = arith.mulf %19, %20 : vector<16x512xf32>
    %22 = arith.addf %16, %21 : vector<16x512xf32>
    %23 = vector.extract_strided_slice %0 {offsets = [0, 2], sizes = [16, 1], strides = [1, 1]} : vector<16x6xf32> to vector<16x1xf32>
    %24 = vector.extract_strided_slice %9 {offsets = [2, 0], sizes = [1, 512], strides = [1, 1]} : vector<6x512xf32> to vector<1x512xf32>
    %25 = vector.broadcast %23 : vector<16x1xf32> to vector<16x512xf32>
    %26 = vector.broadcast %24 : vector<1x512xf32> to vector<16x512xf32>
    %27 = arith.mulf %25, %26 : vector<16x512xf32>
    %28 = arith.addf %22, %27 : vector<16x512xf32>
    %29 = vector.extract_strided_slice %0 {offsets = [0, 3], sizes = [16, 1], strides = [1, 1]} : vector<16x6xf32> to vector<16x1xf32>
    %30 = vector.extract_strided_slice %9 {offsets = [3, 0], sizes = [1, 512], strides = [1, 1]} : vector<6x512xf32> to vector<1x512xf32>
    %31 = vector.broadcast %29 : vector<16x1xf32> to vector<16x512xf32>
    %32 = vector.broadcast %30 : vector<1x512xf32> to vector<16x512xf32>
    %33 = arith.mulf %31, %32 : vector<16x512xf32>
    %34 = arith.addf %28, %33 : vector<16x512xf32>
    %35 = vector.extract_strided_slice %0 {offsets = [0, 4], sizes = [16, 1], strides = [1, 1]} : vector<16x6xf32> to vector<16x1xf32>
    %36 = vector.extract_strided_slice %9 {offsets = [4, 0], sizes = [1, 512], strides = [1, 1]} : vector<6x512xf32> to vector<1x512xf32>
    %37 = vector.broadcast %35 : vector<16x1xf32> to vector<16x512xf32>
    %38 = vector.broadcast %36 : vector<1x512xf32> to vector<16x512xf32>
    %39 = arith.mulf %37, %38 : vector<16x512xf32>
    %40 = arith.addf %34, %39 : vector<16x512xf32>
    %41 = vector.extract_strided_slice %0 {offsets = [0, 5], sizes = [16, 1], strides = [1, 1]} : vector<16x6xf32> to vector<16x1xf32>
    %42 = vector.extract_strided_slice %9 {offsets = [5, 0], sizes = [1, 512], strides = [1, 1]} : vector<6x512xf32> to vector<1x512xf32>
    %43 = vector.broadcast %41 : vector<16x1xf32> to vector<16x512xf32>
    %44 = vector.broadcast %42 : vector<1x512xf32> to vector<16x512xf32>
    %45 = arith.mulf %43, %44 : vector<16x512xf32>
    %46 = arith.addf %40, %45 : vector<16x512xf32>
    %cst = arith.constant 0.000000e+00 : f32
    %47 = vector.broadcast %cst : f32 to vector<16x512xf32>
    %48 = arith.maximumf %46, %47 : vector<16x512xf32>
    %49 = vector.extract_strided_slice %2 {offsets = [0, 0], sizes = [16, 1], strides = [1, 1]} : vector<16x16xf32> to vector<16x1xf32>
    %50 = vector.extract_strided_slice %48 {offsets = [0, 0], sizes = [1, 512], strides = [1, 1]} : vector<16x512xf32> to vector<1x512xf32>
    %51 = vector.broadcast %49 : vector<16x1xf32> to vector<16x512xf32>
    %52 = vector.broadcast %50 : vector<1x512xf32> to vector<16x512xf32>
    %53 = arith.mulf %51, %52 : vector<16x512xf32>
    %54 = vector.broadcast %3 : vector<16x1xf32> to vector<16x512xf32>
    %55 = arith.addf %53, %54 : vector<16x512xf32>
    %56 = vector.extract_strided_slice %2 {offsets = [0, 1], sizes = [16, 1], strides = [1, 1]} : vector<16x16xf32> to vector<16x1xf32>
    %57 = vector.extract_strided_slice %48 {offsets = [1, 0], sizes = [1, 512], strides = [1, 1]} : vector<16x512xf32> to vector<1x512xf32>
    %58 = vector.broadcast %56 : vector<16x1xf32> to vector<16x512xf32>
    %59 = vector.broadcast %57 : vector<1x512xf32> to vector<16x512xf32>
    %60 = arith.mulf %58, %59 : vector<16x512xf32>
    %61 = arith.addf %55, %60 : vector<16x512xf32>
    %62 = vector.extract_strided_slice %2 {offsets = [0, 2], sizes = [16, 1], strides = [1, 1]} : vector<16x16xf32> to vector<16x1xf32>
    %63 = vector.extract_strided_slice %48 {offsets = [2, 0], sizes = [1, 512], strides = [1, 1]} : vector<16x512xf32> to vector<1x512xf32>
    %64 = vector.broadcast %62 : vector<16x1xf32> to vector<16x512xf32>
    %65 = vector.broadcast %63 : vector<1x512xf32> to vector<16x512xf32>
    %66 = arith.mulf %64, %65 : vector<16x512xf32>
    %67 = arith.addf %61, %66 : vector<16x512xf32>
    %68 = vector.extract_strided_slice %2 {offsets = [0, 3], sizes = [16, 1], strides = [1, 1]} : vector<16x16xf32> to vector<16x1xf32>
    %69 = vector.extract_strided_slice %48 {offsets = [3, 0], sizes = [1, 512], strides = [1, 1]} : vector<16x512xf32> to vector<1x512xf32>
    %70 = vector.broadcast %68 : vector<16x1xf32> to vector<16x512xf32>
    %71 = vector.broadcast %69 : vector<1x512xf32> to vector<16x512xf32>
    %72 = arith.mulf %70, %71 : vector<16x512xf32>
    %73 = arith.addf %67, %72 : vector<16x512xf32>
    %74 = vector.extract_strided_slice %2 {offsets = [0, 4], sizes = [16, 1], strides = [1, 1]} : vector<16x16xf32> to vector<16x1xf32>
    %75 = vector.extract_strided_slice %48 {offsets = [4, 0], sizes = [1, 512], strides = [1, 1]} : vector<16x512xf32> to vector<1x512xf32>
    %76 = vector.broadcast %74 : vector<16x1xf32> to vector<16x512xf32>
    %77 = vector.broadcast %75 : vector<1x512xf32> to vector<16x512xf32>
    %78 = arith.mulf %76, %77 : vector<16x512xf32>
    %79 = arith.addf %73, %78 : vector<16x512xf32>
    %80 = vector.extract_strided_slice %2 {offsets = [0, 5], sizes = [16, 1], strides = [1, 1]} : vector<16x16xf32> to vector<16x1xf32>
    %81 = vector.extract_strided_slice %48 {offsets = [5, 0], sizes = [1, 512], strides = [1, 1]} : vector<16x512xf32> to vector<1x512xf32>
    %82 = vector.broadcast %80 : vector<16x1xf32> to vector<16x512xf32>
    %83 = vector.broadcast %81 : vector<1x512xf32> to vector<16x512xf32>
    %84 = arith.mulf %82, %83 : vector<16x512xf32>
    %85 = arith.addf %79, %84 : vector<16x512xf32>
    %86 = vector.extract_strided_slice %2 {offsets = [0, 6], sizes = [16, 1], strides = [1, 1]} : vector<16x16xf32> to vector<16x1xf32>
    %87 = vector.extract_strided_slice %48 {offsets = [6, 0], sizes = [1, 512], strides = [1, 1]} : vector<16x512xf32> to vector<1x512xf32>
    %88 = vector.broadcast %86 : vector<16x1xf32> to vector<16x512xf32>
    %89 = vector.broadcast %87 : vector<1x512xf32> to vector<16x512xf32>
    %90 = arith.mulf %88, %89 : vector<16x512xf32>
    %91 = arith.addf %85, %90 : vector<16x512xf32>
    %92 = vector.extract_strided_slice %2 {offsets = [0, 7], sizes = [16, 1], strides = [1, 1]} : vector<16x16xf32> to vector<16x1xf32>
    %93 = vector.extract_strided_slice %48 {offsets = [7, 0], sizes = [1, 512], strides = [1, 1]} : vector<16x512xf32> to vector<1x512xf32>
    %94 = vector.broadcast %92 : vector<16x1xf32> to vector<16x512xf32>
    %95 = vector.broadcast %93 : vector<1x512xf32> to vector<16x512xf32>
    %96 = arith.mulf %94, %95 : vector<16x512xf32>
    %97 = arith.addf %91, %96 : vector<16x512xf32>
    %98 = vector.extract_strided_slice %2 {offsets = [0, 8], sizes = [16, 1], strides = [1, 1]} : vector<16x16xf32> to vector<16x1xf32>
    %99 = vector.extract_strided_slice %48 {offsets = [8, 0], sizes = [1, 512], strides = [1, 1]} : vector<16x512xf32> to vector<1x512xf32>
    %100 = vector.broadcast %98 : vector<16x1xf32> to vector<16x512xf32>
    %101 = vector.broadcast %99 : vector<1x512xf32> to vector<16x512xf32>
    %102 = arith.mulf %100, %101 : vector<16x512xf32>
    %103 = arith.addf %97, %102 : vector<16x512xf32>
    %104 = vector.extract_strided_slice %2 {offsets = [0, 9], sizes = [16, 1], strides = [1, 1]} : vector<16x16xf32> to vector<16x1xf32>
    %105 = vector.extract_strided_slice %48 {offsets = [9, 0], sizes = [1, 512], strides = [1, 1]} : vector<16x512xf32> to vector<1x512xf32>
    %106 = vector.broadcast %104 : vector<16x1xf32> to vector<16x512xf32>
    %107 = vector.broadcast %105 : vector<1x512xf32> to vector<16x512xf32>
    %108 = arith.mulf %106, %107 : vector<16x512xf32>
    %109 = arith.addf %103, %108 : vector<16x512xf32>
    %110 = vector.extract_strided_slice %2 {offsets = [0, 10], sizes = [16, 1], strides = [1, 1]} : vector<16x16xf32> to vector<16x1xf32>
    %111 = vector.extract_strided_slice %48 {offsets = [10, 0], sizes = [1, 512], strides = [1, 1]} : vector<16x512xf32> to vector<1x512xf32>
    %112 = vector.broadcast %110 : vector<16x1xf32> to vector<16x512xf32>
    %113 = vector.broadcast %111 : vector<1x512xf32> to vector<16x512xf32>
    %114 = arith.mulf %112, %113 : vector<16x512xf32>
    %115 = arith.addf %109, %114 : vector<16x512xf32>
    %116 = vector.extract_strided_slice %2 {offsets = [0, 11], sizes = [16, 1], strides = [1, 1]} : vector<16x16xf32> to vector<16x1xf32>
    %117 = vector.extract_strided_slice %48 {offsets = [11, 0], sizes = [1, 512], strides = [1, 1]} : vector<16x512xf32> to vector<1x512xf32>
    %118 = vector.broadcast %116 : vector<16x1xf32> to vector<16x512xf32>
    %119 = vector.broadcast %117 : vector<1x512xf32> to vector<16x512xf32>
    %120 = arith.mulf %118, %119 : vector<16x512xf32>
    %121 = arith.addf %115, %120 : vector<16x512xf32>
    %122 = vector.extract_strided_slice %2 {offsets = [0, 12], sizes = [16, 1], strides = [1, 1]} : vector<16x16xf32> to vector<16x1xf32>
    %123 = vector.extract_strided_slice %48 {offsets = [12, 0], sizes = [1, 512], strides = [1, 1]} : vector<16x512xf32> to vector<1x512xf32>
    %124 = vector.broadcast %122 : vector<16x1xf32> to vector<16x512xf32>
    %125 = vector.broadcast %123 : vector<1x512xf32> to vector<16x512xf32>
    %126 = arith.mulf %124, %125 : vector<16x512xf32>
    %127 = arith.addf %121, %126 : vector<16x512xf32>
    %128 = vector.extract_strided_slice %2 {offsets = [0, 13], sizes = [16, 1], strides = [1, 1]} : vector<16x16xf32> to vector<16x1xf32>
    %129 = vector.extract_strided_slice %48 {offsets = [13, 0], sizes = [1, 512], strides = [1, 1]} : vector<16x512xf32> to vector<1x512xf32>
    %130 = vector.broadcast %128 : vector<16x1xf32> to vector<16x512xf32>
    %131 = vector.broadcast %129 : vector<1x512xf32> to vector<16x512xf32>
    %132 = arith.mulf %130, %131 : vector<16x512xf32>
    %133 = arith.addf %127, %132 : vector<16x512xf32>
    %134 = vector.extract_strided_slice %2 {offsets = [0, 14], sizes = [16, 1], strides = [1, 1]} : vector<16x16xf32> to vector<16x1xf32>
    %135 = vector.extract_strided_slice %48 {offsets = [14, 0], sizes = [1, 512], strides = [1, 1]} : vector<16x512xf32> to vector<1x512xf32>
    %136 = vector.broadcast %134 : vector<16x1xf32> to vector<16x512xf32>
    %137 = vector.broadcast %135 : vector<1x512xf32> to vector<16x512xf32>
    %138 = arith.mulf %136, %137 : vector<16x512xf32>
    %139 = arith.addf %133, %138 : vector<16x512xf32>
    %140 = vector.extract_strided_slice %2 {offsets = [0, 15], sizes = [16, 1], strides = [1, 1]} : vector<16x16xf32> to vector<16x1xf32>
    %141 = vector.extract_strided_slice %48 {offsets = [15, 0], sizes = [1, 512], strides = [1, 1]} : vector<16x512xf32> to vector<1x512xf32>
    %142 = vector.broadcast %140 : vector<16x1xf32> to vector<16x512xf32>
    %143 = vector.broadcast %141 : vector<1x512xf32> to vector<16x512xf32>
    %144 = arith.mulf %142, %143 : vector<16x512xf32>
    %145 = arith.addf %139, %144 : vector<16x512xf32>
    %cst_12 = arith.constant 0.000000e+00 : f32
    %146 = vector.broadcast %cst_12 : f32 to vector<16x512xf32>
    %147 = arith.maximumf %145, %146 : vector<16x512xf32>
    %148 = vector.extract_strided_slice %4 {offsets = [0, 0], sizes = [4, 1], strides = [1, 1]} : vector<4x16xf32> to vector<4x1xf32>
    %149 = vector.extract_strided_slice %147 {offsets = [0, 0], sizes = [1, 512], strides = [1, 1]} : vector<16x512xf32> to vector<1x512xf32>
    %150 = vector.broadcast %148 : vector<4x1xf32> to vector<4x512xf32>
    %151 = vector.broadcast %149 : vector<1x512xf32> to vector<4x512xf32>
    %152 = arith.mulf %150, %151 : vector<4x512xf32>
    %153 = vector.broadcast %5 : vector<4x1xf32> to vector<4x512xf32>
    %154 = arith.addf %152, %153 : vector<4x512xf32>
    %155 = vector.extract_strided_slice %4 {offsets = [0, 1], sizes = [4, 1], strides = [1, 1]} : vector<4x16xf32> to vector<4x1xf32>
    %156 = vector.extract_strided_slice %147 {offsets = [1, 0], sizes = [1, 512], strides = [1, 1]} : vector<16x512xf32> to vector<1x512xf32>
    %157 = vector.broadcast %155 : vector<4x1xf32> to vector<4x512xf32>
    %158 = vector.broadcast %156 : vector<1x512xf32> to vector<4x512xf32>
    %159 = arith.mulf %157, %158 : vector<4x512xf32>
    %160 = arith.addf %154, %159 : vector<4x512xf32>
    %161 = vector.extract_strided_slice %4 {offsets = [0, 2], sizes = [4, 1], strides = [1, 1]} : vector<4x16xf32> to vector<4x1xf32>
    %162 = vector.extract_strided_slice %147 {offsets = [2, 0], sizes = [1, 512], strides = [1, 1]} : vector<16x512xf32> to vector<1x512xf32>
    %163 = vector.broadcast %161 : vector<4x1xf32> to vector<4x512xf32>
    %164 = vector.broadcast %162 : vector<1x512xf32> to vector<4x512xf32>
    %165 = arith.mulf %163, %164 : vector<4x512xf32>
    %166 = arith.addf %160, %165 : vector<4x512xf32>
    %167 = vector.extract_strided_slice %4 {offsets = [0, 3], sizes = [4, 1], strides = [1, 1]} : vector<4x16xf32> to vector<4x1xf32>
    %168 = vector.extract_strided_slice %147 {offsets = [3, 0], sizes = [1, 512], strides = [1, 1]} : vector<16x512xf32> to vector<1x512xf32>
    %169 = vector.broadcast %167 : vector<4x1xf32> to vector<4x512xf32>
    %170 = vector.broadcast %168 : vector<1x512xf32> to vector<4x512xf32>
    %171 = arith.mulf %169, %170 : vector<4x512xf32>
    %172 = arith.addf %166, %171 : vector<4x512xf32>
    %173 = vector.extract_strided_slice %4 {offsets = [0, 4], sizes = [4, 1], strides = [1, 1]} : vector<4x16xf32> to vector<4x1xf32>
    %174 = vector.extract_strided_slice %147 {offsets = [4, 0], sizes = [1, 512], strides = [1, 1]} : vector<16x512xf32> to vector<1x512xf32>
    %175 = vector.broadcast %173 : vector<4x1xf32> to vector<4x512xf32>
    %176 = vector.broadcast %174 : vector<1x512xf32> to vector<4x512xf32>
    %177 = arith.mulf %175, %176 : vector<4x512xf32>
    %178 = arith.addf %172, %177 : vector<4x512xf32>
    %179 = vector.extract_strided_slice %4 {offsets = [0, 5], sizes = [4, 1], strides = [1, 1]} : vector<4x16xf32> to vector<4x1xf32>
    %180 = vector.extract_strided_slice %147 {offsets = [5, 0], sizes = [1, 512], strides = [1, 1]} : vector<16x512xf32> to vector<1x512xf32>
    %181 = vector.broadcast %179 : vector<4x1xf32> to vector<4x512xf32>
    %182 = vector.broadcast %180 : vector<1x512xf32> to vector<4x512xf32>
    %183 = arith.mulf %181, %182 : vector<4x512xf32>
    %184 = arith.addf %178, %183 : vector<4x512xf32>
    %185 = vector.extract_strided_slice %4 {offsets = [0, 6], sizes = [4, 1], strides = [1, 1]} : vector<4x16xf32> to vector<4x1xf32>
    %186 = vector.extract_strided_slice %147 {offsets = [6, 0], sizes = [1, 512], strides = [1, 1]} : vector<16x512xf32> to vector<1x512xf32>
    %187 = vector.broadcast %185 : vector<4x1xf32> to vector<4x512xf32>
    %188 = vector.broadcast %186 : vector<1x512xf32> to vector<4x512xf32>
    %189 = arith.mulf %187, %188 : vector<4x512xf32>
    %190 = arith.addf %184, %189 : vector<4x512xf32>
    %191 = vector.extract_strided_slice %4 {offsets = [0, 7], sizes = [4, 1], strides = [1, 1]} : vector<4x16xf32> to vector<4x1xf32>
    %192 = vector.extract_strided_slice %147 {offsets = [7, 0], sizes = [1, 512], strides = [1, 1]} : vector<16x512xf32> to vector<1x512xf32>
    %193 = vector.broadcast %191 : vector<4x1xf32> to vector<4x512xf32>
    %194 = vector.broadcast %192 : vector<1x512xf32> to vector<4x512xf32>
    %195 = arith.mulf %193, %194 : vector<4x512xf32>
    %196 = arith.addf %190, %195 : vector<4x512xf32>
    %197 = vector.extract_strided_slice %4 {offsets = [0, 8], sizes = [4, 1], strides = [1, 1]} : vector<4x16xf32> to vector<4x1xf32>
    %198 = vector.extract_strided_slice %147 {offsets = [8, 0], sizes = [1, 512], strides = [1, 1]} : vector<16x512xf32> to vector<1x512xf32>
    %199 = vector.broadcast %197 : vector<4x1xf32> to vector<4x512xf32>
    %200 = vector.broadcast %198 : vector<1x512xf32> to vector<4x512xf32>
    %201 = arith.mulf %199, %200 : vector<4x512xf32>
    %202 = arith.addf %196, %201 : vector<4x512xf32>
    %203 = vector.extract_strided_slice %4 {offsets = [0, 9], sizes = [4, 1], strides = [1, 1]} : vector<4x16xf32> to vector<4x1xf32>
    %204 = vector.extract_strided_slice %147 {offsets = [9, 0], sizes = [1, 512], strides = [1, 1]} : vector<16x512xf32> to vector<1x512xf32>
    %205 = vector.broadcast %203 : vector<4x1xf32> to vector<4x512xf32>
    %206 = vector.broadcast %204 : vector<1x512xf32> to vector<4x512xf32>
    %207 = arith.mulf %205, %206 : vector<4x512xf32>
    %208 = arith.addf %202, %207 : vector<4x512xf32>
    %209 = vector.extract_strided_slice %4 {offsets = [0, 10], sizes = [4, 1], strides = [1, 1]} : vector<4x16xf32> to vector<4x1xf32>
    %210 = vector.extract_strided_slice %147 {offsets = [10, 0], sizes = [1, 512], strides = [1, 1]} : vector<16x512xf32> to vector<1x512xf32>
    %211 = vector.broadcast %209 : vector<4x1xf32> to vector<4x512xf32>
    %212 = vector.broadcast %210 : vector<1x512xf32> to vector<4x512xf32>
    %213 = arith.mulf %211, %212 : vector<4x512xf32>
    %214 = arith.addf %208, %213 : vector<4x512xf32>
    %215 = vector.extract_strided_slice %4 {offsets = [0, 11], sizes = [4, 1], strides = [1, 1]} : vector<4x16xf32> to vector<4x1xf32>
    %216 = vector.extract_strided_slice %147 {offsets = [11, 0], sizes = [1, 512], strides = [1, 1]} : vector<16x512xf32> to vector<1x512xf32>
    %217 = vector.broadcast %215 : vector<4x1xf32> to vector<4x512xf32>
    %218 = vector.broadcast %216 : vector<1x512xf32> to vector<4x512xf32>
    %219 = arith.mulf %217, %218 : vector<4x512xf32>
    %220 = arith.addf %214, %219 : vector<4x512xf32>
    %221 = vector.extract_strided_slice %4 {offsets = [0, 12], sizes = [4, 1], strides = [1, 1]} : vector<4x16xf32> to vector<4x1xf32>
    %222 = vector.extract_strided_slice %147 {offsets = [12, 0], sizes = [1, 512], strides = [1, 1]} : vector<16x512xf32> to vector<1x512xf32>
    %223 = vector.broadcast %221 : vector<4x1xf32> to vector<4x512xf32>
    %224 = vector.broadcast %222 : vector<1x512xf32> to vector<4x512xf32>
    %225 = arith.mulf %223, %224 : vector<4x512xf32>
    %226 = arith.addf %220, %225 : vector<4x512xf32>
    %227 = vector.extract_strided_slice %4 {offsets = [0, 13], sizes = [4, 1], strides = [1, 1]} : vector<4x16xf32> to vector<4x1xf32>
    %228 = vector.extract_strided_slice %147 {offsets = [13, 0], sizes = [1, 512], strides = [1, 1]} : vector<16x512xf32> to vector<1x512xf32>
    %229 = vector.broadcast %227 : vector<4x1xf32> to vector<4x512xf32>
    %230 = vector.broadcast %228 : vector<1x512xf32> to vector<4x512xf32>
    %231 = arith.mulf %229, %230 : vector<4x512xf32>
    %232 = arith.addf %226, %231 : vector<4x512xf32>
    %233 = vector.extract_strided_slice %4 {offsets = [0, 14], sizes = [4, 1], strides = [1, 1]} : vector<4x16xf32> to vector<4x1xf32>
    %234 = vector.extract_strided_slice %147 {offsets = [14, 0], sizes = [1, 512], strides = [1, 1]} : vector<16x512xf32> to vector<1x512xf32>
    %235 = vector.broadcast %233 : vector<4x1xf32> to vector<4x512xf32>
    %236 = vector.broadcast %234 : vector<1x512xf32> to vector<4x512xf32>
    %237 = arith.mulf %235, %236 : vector<4x512xf32>
    %238 = arith.addf %232, %237 : vector<4x512xf32>
    %239 = vector.extract_strided_slice %4 {offsets = [0, 15], sizes = [4, 1], strides = [1, 1]} : vector<4x16xf32> to vector<4x1xf32>
    %240 = vector.extract_strided_slice %147 {offsets = [15, 0], sizes = [1, 512], strides = [1, 1]} : vector<16x512xf32> to vector<1x512xf32>
    %241 = vector.broadcast %239 : vector<4x1xf32> to vector<4x512xf32>
    %242 = vector.broadcast %240 : vector<1x512xf32> to vector<4x512xf32>
    %243 = arith.mulf %241, %242 : vector<4x512xf32>
    %244 = arith.addf %238, %243 : vector<4x512xf32>
    %c0_13 = arith.constant 0 : index
    %245 = arith.index_cast %7 : i32 to index
    %246 = vector.load %arg8[%c0_13, %245] : memref<4x1024xf32, #tpu.memory_space<vmem>>, vector<4x512xf32>
    tpu.vector_store %arg8[%c0_13, %245], %244 {strides = array<i32>} : memref<4x1024xf32, #tpu.memory_space<vmem>>, vector<4x512xf32>,
    %c1_i32 = arith.constant 1 : i32
    %c512_i32_14 = arith.constant 512 : i32
    %247 = arith.muli %c1_i32, %c512_i32_14 : i32
    %248 = tpu.assume_multiple %247, 512 : i32
    %c0_15 = arith.constant 0 : index
    %249 = arith.index_cast %248 : i32 to index
    %250 = vector.load %arg1[%c0_15, %249] : memref<6x1024xf32, #tpu.memory_space<vmem>>, vector<6x512xf32>
    %251 = vector.extract_strided_slice %0 {offsets = [0, 0], sizes = [16, 1], strides = [1, 1]} : vector<16x6xf32> to vector<16x1xf32>
    %252 = vector.extract_strided_slice %250 {offsets = [0, 0], sizes = [1, 512], strides = [1, 1]} : vector<6x512xf32> to vector<1x512xf32>
    %253 = vector.broadcast %251 : vector<16x1xf32> to vector<16x512xf32>
    %254 = vector.broadcast %252 : vector<1x512xf32> to vector<16x512xf32>
    %255 = arith.mulf %253, %254 : vector<16x512xf32>
    %256 = vector.broadcast %1 : vector<16x1xf32> to vector<16x512xf32>
    %257 = arith.addf %255, %256 : vector<16x512xf32>
    %258 = vector.extract_strided_slice %0 {offsets = [0, 1], sizes = [16, 1], strides = [1, 1]} : vector<16x6xf32> to vector<16x1xf32>
    %259 = vector.extract_strided_slice %250 {offsets = [1, 0], sizes = [1, 512], strides = [1, 1]} : vector<6x512xf32> to vector<1x512xf32>
    %260 = vector.broadcast %258 : vector<16x1xf32> to vector<16x512xf32>
    %261 = vector.broadcast %259 : vector<1x512xf32> to vector<16x512xf32>
    %262 = arith.mulf %260, %261 : vector<16x512xf32>
    %263 = arith.addf %257, %262 : vector<16x512xf32>
    %264 = vector.extract_strided_slice %0 {offsets = [0, 2], sizes = [16, 1], strides = [1, 1]} : vector<16x6xf32> to vector<16x1xf32>
    %265 = vector.extract_strided_slice %250 {offsets = [2, 0], sizes = [1, 512], strides = [1, 1]} : vector<6x512xf32> to vector<1x512xf32>
    %266 = vector.broadcast %264 : vector<16x1xf32> to vector<16x512xf32>
    %267 = vector.broadcast %265 : vector<1x512xf32> to vector<16x512xf32>
    %268 = arith.mulf %266, %267 : vector<16x512xf32>
    %269 = arith.addf %263, %268 : vector<16x512xf32>
    %270 = vector.extract_strided_slice %0 {offsets = [0, 3], sizes = [16, 1], strides = [1, 1]} : vector<16x6xf32> to vector<16x1xf32>
    %271 = vector.extract_strided_slice %250 {offsets = [3, 0], sizes = [1, 512], strides = [1, 1]} : vector<6x512xf32> to vector<1x512xf32>
    %272 = vector.broadcast %270 : vector<16x1xf32> to vector<16x512xf32>
    %273 = vector.broadcast %271 : vector<1x512xf32> to vector<16x512xf32>
    %274 = arith.mulf %272, %273 : vector<16x512xf32>
    %275 = arith.addf %269, %274 : vector<16x512xf32>
    %276 = vector.extract_strided_slice %0 {offsets = [0, 4], sizes = [16, 1], strides = [1, 1]} : vector<16x6xf32> to vector<16x1xf32>
    %277 = vector.extract_strided_slice %250 {offsets = [4, 0], sizes = [1, 512], strides = [1, 1]} : vector<6x512xf32> to vector<1x512xf32>
    %278 = vector.broadcast %276 : vector<16x1xf32> to vector<16x512xf32>
    %279 = vector.broadcast %277 : vector<1x512xf32> to vector<16x512xf32>
    %280 = arith.mulf %278, %279 : vector<16x512xf32>
    %281 = arith.addf %275, %280 : vector<16x512xf32>
    %282 = vector.extract_strided_slice %0 {offsets = [0, 5], sizes = [16, 1], strides = [1, 1]} : vector<16x6xf32> to vector<16x1xf32>
    %283 = vector.extract_strided_slice %250 {offsets = [5, 0], sizes = [1, 512], strides = [1, 1]} : vector<6x512xf32> to vector<1x512xf32>
    %284 = vector.broadcast %282 : vector<16x1xf32> to vector<16x512xf32>
    %285 = vector.broadcast %283 : vector<1x512xf32> to vector<16x512xf32>
    %286 = arith.mulf %284, %285 : vector<16x512xf32>
    %287 = arith.addf %281, %286 : vector<16x512xf32>
    %cst_16 = arith.constant 0.000000e+00 : f32
    %288 = vector.broadcast %cst_16 : f32 to vector<16x512xf32>
    %289 = arith.maximumf %287, %288 : vector<16x512xf32>
    %290 = vector.extract_strided_slice %2 {offsets = [0, 0], sizes = [16, 1], strides = [1, 1]} : vector<16x16xf32> to vector<16x1xf32>
    %291 = vector.extract_strided_slice %289 {offsets = [0, 0], sizes = [1, 512], strides = [1, 1]} : vector<16x512xf32> to vector<1x512xf32>
    %292 = vector.broadcast %290 : vector<16x1xf32> to vector<16x512xf32>
    %293 = vector.broadcast %291 : vector<1x512xf32> to vector<16x512xf32>
    %294 = arith.mulf %292, %293 : vector<16x512xf32>
    %295 = vector.broadcast %3 : vector<16x1xf32> to vector<16x512xf32>
    %296 = arith.addf %294, %295 : vector<16x512xf32>
    %297 = vector.extract_strided_slice %2 {offsets = [0, 1], sizes = [16, 1], strides = [1, 1]} : vector<16x16xf32> to vector<16x1xf32>
    %298 = vector.extract_strided_slice %289 {offsets = [1, 0], sizes = [1, 512], strides = [1, 1]} : vector<16x512xf32> to vector<1x512xf32>
    %299 = vector.broadcast %297 : vector<16x1xf32> to vector<16x512xf32>
    %300 = vector.broadcast %298 : vector<1x512xf32> to vector<16x512xf32>
    %301 = arith.mulf %299, %300 : vector<16x512xf32>
    %302 = arith.addf %296, %301 : vector<16x512xf32>
    %303 = vector.extract_strided_slice %2 {offsets = [0, 2], sizes = [16, 1], strides = [1, 1]} : vector<16x16xf32> to vector<16x1xf32>
    %304 = vector.extract_strided_slice %289 {offsets = [2, 0], sizes = [1, 512], strides = [1, 1]} : vector<16x512xf32> to vector<1x512xf32>
    %305 = vector.broadcast %303 : vector<16x1xf32> to vector<16x512xf32>
    %306 = vector.broadcast %304 : vector<1x512xf32> to vector<16x512xf32>
    %307 = arith.mulf %305, %306 : vector<16x512xf32>
    %308 = arith.addf %302, %307 : vector<16x512xf32>
    %309 = vector.extract_strided_slice %2 {offsets = [0, 3], sizes = [16, 1], strides = [1, 1]} : vector<16x16xf32> to vector<16x1xf32>
    %310 = vector.extract_strided_slice %289 {offsets = [3, 0], sizes = [1, 512], strides = [1, 1]} : vector<16x512xf32> to vector<1x512xf32>
    %311 = vector.broadcast %309 : vector<16x1xf32> to vector<16x512xf32>
    %312 = vector.broadcast %310 : vector<1x512xf32> to vector<16x512xf32>
    %313 = arith.mulf %311, %312 : vector<16x512xf32>
    %314 = arith.addf %308, %313 : vector<16x512xf32>
    %315 = vector.extract_strided_slice %2 {offsets = [0, 4], sizes = [16, 1], strides = [1, 1]} : vector<16x16xf32> to vector<16x1xf32>
    %316 = vector.extract_strided_slice %289 {offsets = [4, 0], sizes = [1, 512], strides = [1, 1]} : vector<16x512xf32> to vector<1x512xf32>
    %317 = vector.broadcast %315 : vector<16x1xf32> to vector<16x512xf32>
    %318 = vector.broadcast %316 : vector<1x512xf32> to vector<16x512xf32>
    %319 = arith.mulf %317, %318 : vector<16x512xf32>
    %320 = arith.addf %314, %319 : vector<16x512xf32>
    %321 = vector.extract_strided_slice %2 {offsets = [0, 5], sizes = [16, 1], strides = [1, 1]} : vector<16x16xf32> to vector<16x1xf32>
    %322 = vector.extract_strided_slice %289 {offsets = [5, 0], sizes = [1, 512], strides = [1, 1]} : vector<16x512xf32> to vector<1x512xf32>
    %323 = vector.broadcast %321 : vector<16x1xf32> to vector<16x512xf32>
    %324 = vector.broadcast %322 : vector<1x512xf32> to vector<16x512xf32>
    %325 = arith.mulf %323, %324 : vector<16x512xf32>
    %326 = arith.addf %320, %325 : vector<16x512xf32>
    %327 = vector.extract_strided_slice %2 {offsets = [0, 6], sizes = [16, 1], strides = [1, 1]} : vector<16x16xf32> to vector<16x1xf32>
    %328 = vector.extract_strided_slice %289 {offsets = [6, 0], sizes = [1, 512], strides = [1, 1]} : vector<16x512xf32> to vector<1x512xf32>
    %329 = vector.broadcast %327 : vector<16x1xf32> to vector<16x512xf32>
    %330 = vector.broadcast %328 : vector<1x512xf32> to vector<16x512xf32>
    %331 = arith.mulf %329, %330 : vector<16x512xf32>
    %332 = arith.addf %326, %331 : vector<16x512xf32>
    %333 = vector.extract_strided_slice %2 {offsets = [0, 7], sizes = [16, 1], strides = [1, 1]} : vector<16x16xf32> to vector<16x1xf32>
    %334 = vector.extract_strided_slice %289 {offsets = [7, 0], sizes = [1, 512], strides = [1, 1]} : vector<16x512xf32> to vector<1x512xf32>
    %335 = vector.broadcast %333 : vector<16x1xf32> to vector<16x512xf32>
    %336 = vector.broadcast %334 : vector<1x512xf32> to vector<16x512xf32>
    %337 = arith.mulf %335, %336 : vector<16x512xf32>
    %338 = arith.addf %332, %337 : vector<16x512xf32>
    %339 = vector.extract_strided_slice %2 {offsets = [0, 8], sizes = [16, 1], strides = [1, 1]} : vector<16x16xf32> to vector<16x1xf32>
    %340 = vector.extract_strided_slice %289 {offsets = [8, 0], sizes = [1, 512], strides = [1, 1]} : vector<16x512xf32> to vector<1x512xf32>
    %341 = vector.broadcast %339 : vector<16x1xf32> to vector<16x512xf32>
    %342 = vector.broadcast %340 : vector<1x512xf32> to vector<16x512xf32>
    %343 = arith.mulf %341, %342 : vector<16x512xf32>
    %344 = arith.addf %338, %343 : vector<16x512xf32>
    %345 = vector.extract_strided_slice %2 {offsets = [0, 9], sizes = [16, 1], strides = [1, 1]} : vector<16x16xf32> to vector<16x1xf32>
    %346 = vector.extract_strided_slice %289 {offsets = [9, 0], sizes = [1, 512], strides = [1, 1]} : vector<16x512xf32> to vector<1x512xf32>
    %347 = vector.broadcast %345 : vector<16x1xf32> to vector<16x512xf32>
    %348 = vector.broadcast %346 : vector<1x512xf32> to vector<16x512xf32>
    %349 = arith.mulf %347, %348 : vector<16x512xf32>
    %350 = arith.addf %344, %349 : vector<16x512xf32>
    %351 = vector.extract_strided_slice %2 {offsets = [0, 10], sizes = [16, 1], strides = [1, 1]} : vector<16x16xf32> to vector<16x1xf32>
    %352 = vector.extract_strided_slice %289 {offsets = [10, 0], sizes = [1, 512], strides = [1, 1]} : vector<16x512xf32> to vector<1x512xf32>
    %353 = vector.broadcast %351 : vector<16x1xf32> to vector<16x512xf32>
    %354 = vector.broadcast %352 : vector<1x512xf32> to vector<16x512xf32>
    %355 = arith.mulf %353, %354 : vector<16x512xf32>
    %356 = arith.addf %350, %355 : vector<16x512xf32>
    %357 = vector.extract_strided_slice %2 {offsets = [0, 11], sizes = [16, 1], strides = [1, 1]} : vector<16x16xf32> to vector<16x1xf32>
    %358 = vector.extract_strided_slice %289 {offsets = [11, 0], sizes = [1, 512], strides = [1, 1]} : vector<16x512xf32> to vector<1x512xf32>
    %359 = vector.broadcast %357 : vector<16x1xf32> to vector<16x512xf32>
    %360 = vector.broadcast %358 : vector<1x512xf32> to vector<16x512xf32>
    %361 = arith.mulf %359, %360 : vector<16x512xf32>
    %362 = arith.addf %356, %361 : vector<16x512xf32>
    %363 = vector.extract_strided_slice %2 {offsets = [0, 12], sizes = [16, 1], strides = [1, 1]} : vector<16x16xf32> to vector<16x1xf32>
    %364 = vector.extract_strided_slice %289 {offsets = [12, 0], sizes = [1, 512], strides = [1, 1]} : vector<16x512xf32> to vector<1x512xf32>
    %365 = vector.broadcast %363 : vector<16x1xf32> to vector<16x512xf32>
    %366 = vector.broadcast %364 : vector<1x512xf32> to vector<16x512xf32>
    %367 = arith.mulf %365, %366 : vector<16x512xf32>
    %368 = arith.addf %362, %367 : vector<16x512xf32>
    %369 = vector.extract_strided_slice %2 {offsets = [0, 13], sizes = [16, 1], strides = [1, 1]} : vector<16x16xf32> to vector<16x1xf32>
    %370 = vector.extract_strided_slice %289 {offsets = [13, 0], sizes = [1, 512], strides = [1, 1]} : vector<16x512xf32> to vector<1x512xf32>
    %371 = vector.broadcast %369 : vector<16x1xf32> to vector<16x512xf32>
    %372 = vector.broadcast %370 : vector<1x512xf32> to vector<16x512xf32>
    %373 = arith.mulf %371, %372 : vector<16x512xf32>
    %374 = arith.addf %368, %373 : vector<16x512xf32>
    %375 = vector.extract_strided_slice %2 {offsets = [0, 14], sizes = [16, 1], strides = [1, 1]} : vector<16x16xf32> to vector<16x1xf32>
    %376 = vector.extract_strided_slice %289 {offsets = [14, 0], sizes = [1, 512], strides = [1, 1]} : vector<16x512xf32> to vector<1x512xf32>
    %377 = vector.broadcast %375 : vector<16x1xf32> to vector<16x512xf32>
    %378 = vector.broadcast %376 : vector<1x512xf32> to vector<16x512xf32>
    %379 = arith.mulf %377, %378 : vector<16x512xf32>
    %380 = arith.addf %374, %379 : vector<16x512xf32>
    %381 = vector.extract_strided_slice %2 {offsets = [0, 15], sizes = [16, 1], strides = [1, 1]} : vector<16x16xf32> to vector<16x1xf32>
    %382 = vector.extract_strided_slice %289 {offsets = [15, 0], sizes = [1, 512], strides = [1, 1]} : vector<16x512xf32> to vector<1x512xf32>
    %383 = vector.broadcast %381 : vector<16x1xf32> to vector<16x512xf32>
    %384 = vector.broadcast %382 : vector<1x512xf32> to vector<16x512xf32>
    %385 = arith.mulf %383, %384 : vector<16x512xf32>
    %386 = arith.addf %380, %385 : vector<16x512xf32>
    %cst_17 = arith.constant 0.000000e+00 : f32
    %387 = vector.broadcast %cst_17 : f32 to vector<16x512xf32>
    %388 = arith.maximumf %386, %387 : vector<16x512xf32>
    %389 = vector.extract_strided_slice %4 {offsets = [0, 0], sizes = [4, 1], strides = [1, 1]} : vector<4x16xf32> to vector<4x1xf32>
    %390 = vector.extract_strided_slice %388 {offsets = [0, 0], sizes = [1, 512], strides = [1, 1]} : vector<16x512xf32> to vector<1x512xf32>
    %391 = vector.broadcast %389 : vector<4x1xf32> to vector<4x512xf32>
    %392 = vector.broadcast %390 : vector<1x512xf32> to vector<4x512xf32>
    %393 = arith.mulf %391, %392 : vector<4x512xf32>
    %394 = vector.broadcast %5 : vector<4x1xf32> to vector<4x512xf32>
    %395 = arith.addf %393, %394 : vector<4x512xf32>
    %396 = vector.extract_strided_slice %4 {offsets = [0, 1], sizes = [4, 1], strides = [1, 1]} : vector<4x16xf32> to vector<4x1xf32>
    %397 = vector.extract_strided_slice %388 {offsets = [1, 0], sizes = [1, 512], strides = [1, 1]} : vector<16x512xf32> to vector<1x512xf32>
    %398 = vector.broadcast %396 : vector<4x1xf32> to vector<4x512xf32>
    %399 = vector.broadcast %397 : vector<1x512xf32> to vector<4x512xf32>
    %400 = arith.mulf %398, %399 : vector<4x512xf32>
    %401 = arith.addf %395, %400 : vector<4x512xf32>
    %402 = vector.extract_strided_slice %4 {offsets = [0, 2], sizes = [4, 1], strides = [1, 1]} : vector<4x16xf32> to vector<4x1xf32>
    %403 = vector.extract_strided_slice %388 {offsets = [2, 0], sizes = [1, 512], strides = [1, 1]} : vector<16x512xf32> to vector<1x512xf32>
    %404 = vector.broadcast %402 : vector<4x1xf32> to vector<4x512xf32>
    %405 = vector.broadcast %403 : vector<1x512xf32> to vector<4x512xf32>
    %406 = arith.mulf %404, %405 : vector<4x512xf32>
    %407 = arith.addf %401, %406 : vector<4x512xf32>
    %408 = vector.extract_strided_slice %4 {offsets = [0, 3], sizes = [4, 1], strides = [1, 1]} : vector<4x16xf32> to vector<4x1xf32>
    %409 = vector.extract_strided_slice %388 {offsets = [3, 0], sizes = [1, 512], strides = [1, 1]} : vector<16x512xf32> to vector<1x512xf32>
    %410 = vector.broadcast %408 : vector<4x1xf32> to vector<4x512xf32>
    %411 = vector.broadcast %409 : vector<1x512xf32> to vector<4x512xf32>
    %412 = arith.mulf %410, %411 : vector<4x512xf32>
    %413 = arith.addf %407, %412 : vector<4x512xf32>
    %414 = vector.extract_strided_slice %4 {offsets = [0, 4], sizes = [4, 1], strides = [1, 1]} : vector<4x16xf32> to vector<4x1xf32>
    %415 = vector.extract_strided_slice %388 {offsets = [4, 0], sizes = [1, 512], strides = [1, 1]} : vector<16x512xf32> to vector<1x512xf32>
    %416 = vector.broadcast %414 : vector<4x1xf32> to vector<4x512xf32>
    %417 = vector.broadcast %415 : vector<1x512xf32> to vector<4x512xf32>
    %418 = arith.mulf %416, %417 : vector<4x512xf32>
    %419 = arith.addf %413, %418 : vector<4x512xf32>
    %420 = vector.extract_strided_slice %4 {offsets = [0, 5], sizes = [4, 1], strides = [1, 1]} : vector<4x16xf32> to vector<4x1xf32>
    %421 = vector.extract_strided_slice %388 {offsets = [5, 0], sizes = [1, 512], strides = [1, 1]} : vector<16x512xf32> to vector<1x512xf32>
    %422 = vector.broadcast %420 : vector<4x1xf32> to vector<4x512xf32>
    %423 = vector.broadcast %421 : vector<1x512xf32> to vector<4x512xf32>
    %424 = arith.mulf %422, %423 : vector<4x512xf32>
    %425 = arith.addf %419, %424 : vector<4x512xf32>
    %426 = vector.extract_strided_slice %4 {offsets = [0, 6], sizes = [4, 1], strides = [1, 1]} : vector<4x16xf32> to vector<4x1xf32>
    %427 = vector.extract_strided_slice %388 {offsets = [6, 0], sizes = [1, 512], strides = [1, 1]} : vector<16x512xf32> to vector<1x512xf32>
    %428 = vector.broadcast %426 : vector<4x1xf32> to vector<4x512xf32>
    %429 = vector.broadcast %427 : vector<1x512xf32> to vector<4x512xf32>
    %430 = arith.mulf %428, %429 : vector<4x512xf32>
    %431 = arith.addf %425, %430 : vector<4x512xf32>
    %432 = vector.extract_strided_slice %4 {offsets = [0, 7], sizes = [4, 1], strides = [1, 1]} : vector<4x16xf32> to vector<4x1xf32>
    %433 = vector.extract_strided_slice %388 {offsets = [7, 0], sizes = [1, 512], strides = [1, 1]} : vector<16x512xf32> to vector<1x512xf32>
    %434 = vector.broadcast %432 : vector<4x1xf32> to vector<4x512xf32>
    %435 = vector.broadcast %433 : vector<1x512xf32> to vector<4x512xf32>
    %436 = arith.mulf %434, %435 : vector<4x512xf32>
    %437 = arith.addf %431, %436 : vector<4x512xf32>
    %438 = vector.extract_strided_slice %4 {offsets = [0, 8], sizes = [4, 1], strides = [1, 1]} : vector<4x16xf32> to vector<4x1xf32>
    %439 = vector.extract_strided_slice %388 {offsets = [8, 0], sizes = [1, 512], strides = [1, 1]} : vector<16x512xf32> to vector<1x512xf32>
    %440 = vector.broadcast %438 : vector<4x1xf32> to vector<4x512xf32>
    %441 = vector.broadcast %439 : vector<1x512xf32> to vector<4x512xf32>
    %442 = arith.mulf %440, %441 : vector<4x512xf32>
    %443 = arith.addf %437, %442 : vector<4x512xf32>
    %444 = vector.extract_strided_slice %4 {offsets = [0, 9], sizes = [4, 1], strides = [1, 1]} : vector<4x16xf32> to vector<4x1xf32>
    %445 = vector.extract_strided_slice %388 {offsets = [9, 0], sizes = [1, 512], strides = [1, 1]} : vector<16x512xf32> to vector<1x512xf32>
    %446 = vector.broadcast %444 : vector<4x1xf32> to vector<4x512xf32>
    %447 = vector.broadcast %445 : vector<1x512xf32> to vector<4x512xf32>
    %448 = arith.mulf %446, %447 : vector<4x512xf32>
    %449 = arith.addf %443, %448 : vector<4x512xf32>
    %450 = vector.extract_strided_slice %4 {offsets = [0, 10], sizes = [4, 1], strides = [1, 1]} : vector<4x16xf32> to vector<4x1xf32>
    %451 = vector.extract_strided_slice %388 {offsets = [10, 0], sizes = [1, 512], strides = [1, 1]} : vector<16x512xf32> to vector<1x512xf32>
    %452 = vector.broadcast %450 : vector<4x1xf32> to vector<4x512xf32>
    %453 = vector.broadcast %451 : vector<1x512xf32> to vector<4x512xf32>
    %454 = arith.mulf %452, %453 : vector<4x512xf32>
    %455 = arith.addf %449, %454 : vector<4x512xf32>
    %456 = vector.extract_strided_slice %4 {offsets = [0, 11], sizes = [4, 1], strides = [1, 1]} : vector<4x16xf32> to vector<4x1xf32>
    %457 = vector.extract_strided_slice %388 {offsets = [11, 0], sizes = [1, 512], strides = [1, 1]} : vector<16x512xf32> to vector<1x512xf32>
    %458 = vector.broadcast %456 : vector<4x1xf32> to vector<4x512xf32>
    %459 = vector.broadcast %457 : vector<1x512xf32> to vector<4x512xf32>
    %460 = arith.mulf %458, %459 : vector<4x512xf32>
    %461 = arith.addf %455, %460 : vector<4x512xf32>
    %462 = vector.extract_strided_slice %4 {offsets = [0, 12], sizes = [4, 1], strides = [1, 1]} : vector<4x16xf32> to vector<4x1xf32>
    %463 = vector.extract_strided_slice %388 {offsets = [12, 0], sizes = [1, 512], strides = [1, 1]} : vector<16x512xf32> to vector<1x512xf32>
    %464 = vector.broadcast %462 : vector<4x1xf32> to vector<4x512xf32>
    %465 = vector.broadcast %463 : vector<1x512xf32> to vector<4x512xf32>
    %466 = arith.mulf %464, %465 : vector<4x512xf32>
    %467 = arith.addf %461, %466 : vector<4x512xf32>
    %468 = vector.extract_strided_slice %4 {offsets = [0, 13], sizes = [4, 1], strides = [1, 1]} : vector<4x16xf32> to vector<4x1xf32>
    %469 = vector.extract_strided_slice %388 {offsets = [13, 0], sizes = [1, 512], strides = [1, 1]} : vector<16x512xf32> to vector<1x512xf32>
    %470 = vector.broadcast %468 : vector<4x1xf32> to vector<4x512xf32>
    %471 = vector.broadcast %469 : vector<1x512xf32> to vector<4x512xf32>
    %472 = arith.mulf %470, %471 : vector<4x512xf32>
    %473 = arith.addf %467, %472 : vector<4x512xf32>
    %474 = vector.extract_strided_slice %4 {offsets = [0, 14], sizes = [4, 1], strides = [1, 1]} : vector<4x16xf32> to vector<4x1xf32>
    %475 = vector.extract_strided_slice %388 {offsets = [14, 0], sizes = [1, 512], strides = [1, 1]} : vector<16x512xf32> to vector<1x512xf32>
    %476 = vector.broadcast %474 : vector<4x1xf32> to vector<4x512xf32>
    %477 = vector.broadcast %475 : vector<1x512xf32> to vector<4x512xf32>
    %478 = arith.mulf %476, %477 : vector<4x512xf32>
    %479 = arith.addf %473, %478 : vector<4x512xf32>
    %480 = vector.extract_strided_slice %4 {offsets = [0, 15], sizes = [4, 1], strides = [1, 1]} : vector<4x16xf32> to vector<4x1xf32>
    %481 = vector.extract_strided_slice %388 {offsets = [15, 0], sizes = [1, 512], strides = [1, 1]} : vector<16x512xf32> to vector<1x512xf32>
    %482 = vector.broadcast %480 : vector<4x1xf32> to vector<4x512xf32>
    %483 = vector.broadcast %481 : vector<1x512xf32> to vector<4x512xf32>
    %484 = arith.mulf %482, %483 : vector<4x512xf32>
    %485 = arith.addf %479, %484 : vector<4x512xf32>
    %c0_18 = arith.constant 0 : index
    %486 = arith.index_cast %248 : i32 to index
    %487 = vector.load %arg8[%c0_18, %486] : memref<4x1024xf32, #tpu.memory_space<vmem>>, vector<4x512xf32>
    tpu.vector_store %arg8[%c0_18, %486], %485 {strides = array<i32>} : memref<4x1024xf32, #tpu.memory_space<vmem>>, vector<4x512xf32>,
    %c2_i32 = arith.constant 2 : i32
    return
  }
  func.func @transform_0(%arg0: i32) -> (i32, i32) {
    %c0_i32 = arith.constant 0 : i32
    %c0_i32_0 = arith.constant 0 : i32
    return %c0_i32, %arg0 : i32, i32
  }
  func.func @transform_1(%arg0: i32) -> (i32, i32) {
    %c0_i32 = arith.constant 0 : i32
    %c0_i32_0 = arith.constant 0 : i32
    %c0_i32_1 = arith.constant 0 : i32
    return %c0_i32, %c0_i32_0 : i32, i32
  }
  func.func @transform_2(%arg0: i32) -> (i32, i32) {
    %c0_i32 = arith.constant 0 : i32
    %c0_i32_0 = arith.constant 0 : i32
    %c0_i32_1 = arith.constant 0 : i32
    return %c0_i32, %c0_i32_0 : i32, i32
  }
  func.func @transform_3(%arg0: i32) -> (i32, i32) {
    %c0_i32 = arith.constant 0 : i32
    %c0_i32_0 = arith.constant 0 : i32
    %c0_i32_1 = arith.constant 0 : i32
    return %c0_i32, %c0_i32_0 : i32, i32
  }
  func.func @transform_4(%arg0: i32) -> (i32, i32) {
    %c0_i32 = arith.constant 0 : i32
    %c0_i32_0 = arith.constant 0 : i32
    %c0_i32_1 = arith.constant 0 : i32
    return %c0_i32, %c0_i32_0 : i32, i32
  }
  func.func @transform_5(%arg0: i32) -> (i32, i32) {
    %c0_i32 = arith.constant 0 : i32
    %c0_i32_0 = arith.constant 0 : i32
    %c0_i32_1 = arith.constant 0 : i32
    return %c0_i32, %c0_i32_0 : i32, i32
  }
  func.func @transform_6(%arg0: i32) -> (i32, i32) {
    %c0_i32 = arith.constant 0 : i32
    %c0_i32_0 = arith.constant 0 : i32
    %c0_i32_1 = arith.constant 0 : i32
    return %c0_i32, %c0_i32_0 : i32, i32
  }
  func.func @transform_7(%arg0: i32) -> (i32, i32) {
    %c0_i32 = arith.constant 0 : i32
    %c0_i32_0 = arith.constant 0 : i32
    return %c0_i32, %arg0 : i32, i32
  }
}

</mosaic_0001>

<llo_original>
// kernel: mlp_forward_t.1
$region0: #{mlp_forward_t.1}
  #allocation0 [shape = 'u32[]', space=smem, size = 0x4, offset = 0x4, fixed_abs, tag = 'smem constant byte address 0x4 - core index']
  #allocation1 [shape = 'u32[72,128]{1,0:T(1,128)}', space=vmem, size = 0x9000, scoped, tag = 'internal scratch']
  %s0 = inlined_call_operand.vmem [shape: f32[6,1024], index: 0, kind: input, shape index: {}]
  %s1 = inlined_call_operand.vmem [shape: f32[16,6], index: 1, kind: input, shape index: {}]
  %s2 = inlined_call_operand.vmem [shape: f32[16,1], index: 2, kind: input, shape index: {}]
  %s3 = inlined_call_operand.vmem [shape: f32[16,16], index: 3, kind: input, shape index: {}]
  %s4 = inlined_call_operand.vmem [shape: f32[16,1], index: 4, kind: input, shape index: {}]
  %s5 = inlined_call_operand.vmem [shape: f32[4,16], index: 5, kind: input, shape index: {}]
  %s6 = inlined_call_operand.vmem [shape: f32[4,1], index: 6, kind: input, shape index: {}]
  %s7 = inlined_call_operand.hbm [shape: f32[4,1024], index: 7, kind: output, shape index: {}]
  %s8 = sld [smem:[#allocation0]]
  $region38: #{mlp_forward_t.1} parent=0
    _
  %s10 = ssub.s32 1, %s8
  %s11 = scalar_select 0, %s10, %s8
  $region1: #{mlp_forward_t.1} parent=0
    #allocation2 [shape = 'u8[16384]{0}', space=vmem, size = 0x4000, scoped, tag = 'output window, operand 0, single buffered']
    #allocation3 [shape = 's32[1]{0}', space=sflag, size = 0x4, scoped, tag = 'scoped memory for mlp_forward_t.1']
    %12 = vsyncpa [#allocation3], 0
    // Predicated region
    $region2: #{mlp_forward_t.1} parent=1 // pred_check
      _
    $region3: #{mlp_forward_t.1} parent=1 // pred_check_branch
      %14 = sbr.rel (0) target = $region5
    $region4: #{mlp_forward_t.1} parent=1 // pred_region
      _
    $region5: #{mlp_forward_t.1} parent=1 // pred_fallthru
      _
    // Predicated region
    $region6: #{mlp_forward_t.1} parent=1 // pred_check
      _
    $region7: #{mlp_forward_t.1} parent=1 // pred_check_branch
      %16 = sbr.rel (0) target = $region9
    $region8: #{mlp_forward_t.1} parent=1 // pred_region
      _
    $region9: #{mlp_forward_t.1} parent=1 // pred_fallthru
      _
    // Predicated region
    $region10: #{mlp_forward_t.1} parent=1 // pred_check
      _
    $region11: #{mlp_forward_t.1} parent=1 // pred_check_branch
      %18 = sbr.rel (0) target = $region13
    $region12: #{mlp_forward_t.1} parent=1 // pred_region
      _
    $region13: #{mlp_forward_t.1} parent=1 // pred_fallthru
      _
    // Predicated region
    $region14: #{mlp_forward_t.1} parent=1 // pred_check
      _
    $region15: #{mlp_forward_t.1} parent=1 // pred_check_branch
      %20 = sbr.rel (0) target = $region17
    $region16: #{mlp_forward_t.1} parent=1 // pred_region
      _
    $region17: #{mlp_forward_t.1} parent=1 // pred_fallthru
      _
    // Predicated region
    $region18: #{mlp_forward_t.1} parent=1 // pred_check
      _
    $region19: #{mlp_forward_t.1} parent=1 // pred_check_branch
      %22 = sbr.rel (0) target = $region21
    $region20: #{mlp_forward_t.1} parent=1 // pred_region
      _
    $region21: #{mlp_forward_t.1} parent=1 // pred_fallthru
      _
    // Predicated region
    $region22: #{mlp_forward_t.1} parent=1 // pred_check
      _
    $region23: #{mlp_forward_t.1} parent=1 // pred_check_branch
      %24 = sbr.rel (0) target = $region25
    $region24: #{mlp_forward_t.1} parent=1 // pred_region
      _
    $region25: #{mlp_forward_t.1} parent=1 // pred_fallthru
      _
    // Predicated region
    $region26: #{mlp_forward_t.1} parent=1 // pred_check
      _
    $region27: #{mlp_forward_t.1} parent=1 // pred_check_branch
      %26 = sbr.rel (0) target = $region29
    $region28: #{mlp_forward_t.1} parent=1 // pred_region
      _
    $region29: #{mlp_forward_t.1} parent=1 // pred_fallthru
      _
    %v27 = vld [vmem:[%s1] sm:$0xff]
    %v28 = vld [vmem:[%s1 + $0x8] sm:$0xff]
    %v29 = vld [vmem:[%s2] sm:$0xff]
    %v30 = vld [vmem:[%s2 + $0x8] sm:$0xff]
    %v31 = vld [vmem:[%s3] sm:$0xff]
    %v32 = vld [vmem:[%s3 + $0x8] sm:$0xff]
    %v33 = vld [vmem:[%s4] sm:$0xff]
    %v34 = vld [vmem:[%s4 + $0x8] sm:$0xff]
    %v35 = vld [vmem:[%s5] sm:$0xf]
    %v36 = vld [vmem:[%s6] sm:$0xf]
    %v37 = vld [vmem:[%s0] sm:$0x3f]
    %v38 = vld [vmem:[%s0 + $0x8] sm:$0x3f]
    %v39 = vld [vmem:[%s0 + $0x10] sm:$0x3f]
    %v40 = vld [vmem:[%s0 + $0x18] sm:$0x3f]
    %42 = vset.pattern.permute.xlu0 0
    %43 = vperm.xlu0 %42, %v27
    %v44 = vpop.permute.xlu0 %43
    %47 = vset.pattern.permute.xlu0 0
    %48 = vperm.xlu0 %47, %v28
    %v49 = vpop.permute.xlu0 %48
    %v51 = vperm.slane %v37, 0
    %v52 = vperm.slane %v38, 0
    %v53 = vperm.slane %v39, 0
    %v54 = vperm.slane %v40, 0
    %v55 = vmul.f32 %v44, %v51
    %v56 = vmul.f32 %v44, %v52
    %v57 = vmul.f32 %v44, %v53
    %v58 = vmul.f32 %v44, %v54
    %v59 = vmul.f32 %v49, %v51
    %v60 = vmul.f32 %v49, %v52
    %v61 = vmul.f32 %v49, %v53
    %v62 = vmul.f32 %v49, %v54
    %64 = vset.pattern.permute.xlu0 0
    %65 = vperm.xlu0 %64, %v29
    %v66 = vpop.permute.xlu0 %65
    %69 = vset.pattern.permute.xlu0 0
    %70 = vperm.xlu0 %69, %v30
    %v71 = vpop.permute.xlu0 %70
    %v73 = vadd.f32 %v55, %v66
    %v74 = vadd.f32 %v56, %v66
    %v75 = vadd.f32 %v57, %v66
    %v76 = vadd.f32 %v58, %v66
    %v77 = vadd.f32 %v59, %v71
    %v78 = vadd.f32 %v60, %v71
    %v79 = vadd.f32 %v61, %v71
    %v80 = vadd.f32 %v62, %v71
    %81 = vset.pattern.permute.xlu0 1
    %82 = vperm.xlu0 %81, %v27
    %v83 = vpop.permute.xlu0 %82
    %85 = vset.pattern.permute.xlu0 1
    %86 = vperm.xlu0 %85, %v28
    %v87 = vpop.permute.xlu0 %86
    %v89 = vperm.slane %v37, 1
    %v90 = vperm.slane %v38, 1
    %v91 = vperm.slane %v39, 1
    %v92 = vperm.slane %v40, 1
    %v93 = vmul.f32 %v83, %v89
    %v94 = vmul.f32 %v83, %v90
    %v95 = vmul.f32 %v83, %v91
    %v96 = vmul.f32 %v83, %v92
    %v97 = vmul.f32 %v87, %v89
    %v98 = vmul.f32 %v87, %v90
    %v99 = vmul.f32 %v87, %v91
    %v100 = vmul.f32 %v87, %v92
    %v101 = vadd.f32 %v73, %v93
    %v102 = vadd.f32 %v74, %v94
    %v103 = vadd.f32 %v75, %v95
    %v104 = vadd.f32 %v76, %v96
    %v105 = vadd.f32 %v77, %v97
    %v106 = vadd.f32 %v78, %v98
    %v107 = vadd.f32 %v79, %v99
    %v108 = vadd.f32 %v80, %v100
    %109 = vset.pattern.permute.xlu0 2
    %110 = vperm.xlu0 %109, %v27
    %v111 = vpop.permute.xlu0 %110
    %113 = vset.pattern.permute.xlu0 2
    %114 = vperm.xlu0 %113, %v28
    %v115 = vpop.permute.xlu0 %114
    %v117 = vperm.slane %v37, 2
    %v118 = vperm.slane %v38, 2
    %v119 = vperm.slane %v39, 2
    %v120 = vperm.slane %v40, 2
    %v121 = vmul.f32 %v111, %v117
    %v122 = vmul.f32 %v111, %v118
    %v123 = vmul.f32 %v111, %v119
    %v124 = vmul.f32 %v111, %v120
    %v125 = vmul.f32 %v115, %v117
    %v126 = vmul.f32 %v115, %v118
    %v127 = vmul.f32 %v115, %v119
    %v128 = vmul.f32 %v115, %v120
    %v129 = vadd.f32 %v101, %v121
    %v130 = vadd.f32 %v102, %v122
    %v131 = vadd.f32 %v103, %v123
    %v132 = vadd.f32 %v104, %v124
    %v133 = vadd.f32 %v105, %v125
    %v134 = vadd.f32 %v106, %v126
    %v135 = vadd.f32 %v107, %v127
    %v136 = vadd.f32 %v108, %v128
    %137 = vset.pattern.permute.xlu0 3
    %138 = vperm.xlu0 %137, %v27
    %v139 = vpop.permute.xlu0 %138
    %141 = vset.pattern.permute.xlu0 3
    %142 = vperm.xlu0 %141, %v28
    %v143 = vpop.permute.xlu0 %142
    %v145 = vperm.slane %v37, 3
    %v146 = vperm.slane %v38, 3
    %v147 = vperm.slane %v39, 3
    %v148 = vperm.slane %v40, 3
    %v149 = vmul.f32 %v139, %v145
    %v150 = vmul.f32 %v139, %v146
    %v151 = vmul.f32 %v139, %v147
    %v152 = vmul.f32 %v139, %v148
    %v153 = vmul.f32 %v143, %v145
    %v154 = vmul.f32 %v143, %v146
    %v155 = vmul.f32 %v143, %v147
    %v156 = vmul.f32 %v143, %v148
    %v157 = vadd.f32 %v129, %v149
    %v158 = vadd.f32 %v130, %v150
    %v159 = vadd.f32 %v131, %v151
    %v160 = vadd.f32 %v132, %v152
    %v161 = vadd.f32 %v133, %v153
    %v162 = vadd.f32 %v134, %v154
    %v163 = vadd.f32 %v135, %v155
    %v164 = vadd.f32 %v136, %v156
    %165 = vset.pattern.permute.xlu0 4
    %166 = vperm.xlu0 %165, %v27
    %v167 = vpop.permute.xlu0 %166
    %169 = vset.pattern.permute.xlu0 4
    %170 = vperm.xlu0 %169, %v28
    %v171 = vpop.permute.xlu0 %170
    %v173 = vperm.slane %v37, 4
    %v174 = vperm.slane %v38, 4
    %v175 = vperm.slane %v39, 4
    %v176 = vperm.slane %v40, 4
    %v177 = vmul.f32 %v167, %v173
    %v178 = vmul.f32 %v167, %v174
    %v179 = vmul.f32 %v167, %v175
    %v180 = vmul.f32 %v167, %v176
    %v181 = vmul.f32 %v171, %v173
    %v182 = vmul.f32 %v171, %v174
    %v183 = vmul.f32 %v171, %v175
    %v184 = vmul.f32 %v171, %v176
    %v185 = vadd.f32 %v157, %v177
    %v186 = vadd.f32 %v158, %v178
    %v187 = vadd.f32 %v159, %v179
    %v188 = vadd.f32 %v160, %v180
    %v189 = vadd.f32 %v161, %v181
    %v190 = vadd.f32 %v162, %v182
    %v191 = vadd.f32 %v163, %v183
    %v192 = vadd.f32 %v164, %v184
    %193 = vset.pattern.permute.xlu0 5
    %194 = vperm.xlu0 %193, %v27
    %v195 = vpop.permute.xlu0 %194
    %197 = vset.pattern.permute.xlu0 5
    %198 = vperm.xlu0 %197, %v28
    %v199 = vpop.permute.xlu0 %198
    %v201 = vperm.slane %v37, 5
    %v202 = vperm.slane %v38, 5
    %v203 = vperm.slane %v39, 5
    %v204 = vperm.slane %v40, 5
    %v205 = vmul.f32 %v195, %v201
    %v206 = vmul.f32 %v195, %v202
    %v207 = vmul.f32 %v195, %v203
    %v208 = vmul.f32 %v195, %v204
    %v209 = vmul.f32 %v199, %v201
    %v210 = vmul.f32 %v199, %v202
    %v211 = vmul.f32 %v199, %v203
    %v212 = vmul.f32 %v199, %v204
    %v213 = vadd.f32 %v185, %v205
    %v214 = vadd.f32 %v186, %v206
    %v215 = vadd.f32 %v187, %v207
    %v216 = vadd.f32 %v188, %v208
    %v217 = vadd.f32 %v189, %v209
    %v218 = vadd.f32 %v190, %v210
    %v219 = vadd.f32 %v191, %v211
    %v220 = vadd.f32 %v192, %v212
    %v221 = vmax.f32 %v213, 0.0
    %v222 = vmax.f32 %v214, 0.0
    %v223 = vmax.f32 %v215, 0.0
    %v224 = vmax.f32 %v216, 0.0
    %v225 = vmax.f32 %v217, 0.0
    %v226 = vmax.f32 %v218, 0.0
    %v227 = vmax.f32 %v219, 0.0
    %v228 = vmax.f32 %v220, 0.0
    %230 = vset.pattern.permute.xlu0 0
    %231 = vperm.xlu0 %230, %v31
    %v232 = vpop.permute.xlu0 %231
    %235 = vset.pattern.permute.xlu0 0
    %236 = vperm.xlu0 %235, %v32
    %v237 = vpop.permute.xlu0 %236
    %v239 = vperm.slane %v221, 0
    %v240 = vperm.slane %v222, 0
    %v241 = vperm.slane %v223, 0
    %v242 = vperm.slane %v224, 0
    %v243 = vmul.f32 %v232, %v239
    %v244 = vmul.f32 %v232, %v240
    %v245 = vmul.f32 %v232, %v241
    %v246 = vmul.f32 %v232, %v242
    %v247 = vmul.f32 %v237, %v239
    %v248 = vmul.f32 %v237, %v240
    %v249 = vmul.f32 %v237, %v241
    %v250 = vmul.f32 %v237, %v242
    %252 = vset.pattern.permute.xlu0 0
    %253 = vperm.xlu0 %252, %v33
    %v254 = vpop.permute.xlu0 %253
    %257 = vset.pattern.permute.xlu0 0
    %258 = vperm.xlu0 %257, %v34
    %v259 = vpop.permute.xlu0 %258
    %v261 = vadd.f32 %v243, %v254
    %v262 = vadd.f32 %v244, %v254
    %v263 = vadd.f32 %v245, %v254
    %v264 = vadd.f32 %v246, %v254
    %v265 = vadd.f32 %v247, %v259
    %v266 = vadd.f32 %v248, %v259
    %v267 = vadd.f32 %v249, %v259
    %v268 = vadd.f32 %v250, %v259
    %269 = vset.pattern.permute.xlu0 1
    %270 = vperm.xlu0 %269, %v31
    %v271 = vpop.permute.xlu0 %270
    %273 = vset.pattern.permute.xlu0 1
    %274 = vperm.xlu0 %273, %v32
    %v275 = vpop.permute.xlu0 %274
    %v277 = vperm.slane %v221, 1
    %v278 = vperm.slane %v222, 1
    %v279 = vperm.slane %v223, 1
    %v280 = vperm.slane %v224, 1
    %v281 = vmul.f32 %v271, %v277
    %v282 = vmul.f32 %v271, %v278
    %v283 = vmul.f32 %v271, %v279
    %v284 = vmul.f32 %v271, %v280
    %v285 = vmul.f32 %v275, %v277
    %v286 = vmul.f32 %v275, %v278
    %v287 = vmul.f32 %v275, %v279
    %v288 = vmul.f32 %v275, %v280
    %v289 = vadd.f32 %v261, %v281
    %v290 = vadd.f32 %v262, %v282
    %v291 = vadd.f32 %v263, %v283
    %v292 = vadd.f32 %v264, %v284
    %v293 = vadd.f32 %v265, %v285
    %v294 = vadd.f32 %v266, %v286
    %v295 = vadd.f32 %v267, %v287
    %v296 = vadd.f32 %v268, %v288
    %297 = vset.pattern.permute.xlu0 2
    %298 = vperm.xlu0 %297, %v31
    %v299 = vpop.permute.xlu0 %298
    %301 = vset.pattern.permute.xlu0 2
    %302 = vperm.xlu0 %301, %v32
    %v303 = vpop.permute.xlu0 %302
    %v305 = vperm.slane %v221, 2
    %v306 = vperm.slane %v222, 2
    %v307 = vperm.slane %v223, 2
    %v308 = vperm.slane %v224, 2
    %v309 = vmul.f32 %v299, %v305
    %v310 = vmul.f32 %v299, %v306
    %v311 = vmul.f32 %v299, %v307
    %v312 = vmul.f32 %v299, %v308
    %v313 = vmul.f32 %v303, %v305
    %v314 = vmul.f32 %v303, %v306
    %v315 = vmul.f32 %v303, %v307
    %v316 = vmul.f32 %v303, %v308
    %v317 = vadd.f32 %v289, %v309
    %v318 = vadd.f32 %v290, %v310
    %v319 = vadd.f32 %v291, %v311
    %v320 = vadd.f32 %v292, %v312
    %v321 = vadd.f32 %v293, %v313
    %v322 = vadd.f32 %v294, %v314
    %v323 = vadd.f32 %v295, %v315
    %v324 = vadd.f32 %v296, %v316
    %325 = vset.pattern.permute.xlu0 3
    %326 = vperm.xlu0 %325, %v31
    %v327 = vpop.permute.xlu0 %326
    %329 = vset.pattern.permute.xlu0 3
    %330 = vperm.xlu0 %329, %v32
    %v331 = vpop.permute.xlu0 %330
    %v333 = vperm.slane %v221, 3
    %v334 = vperm.slane %v222, 3
    %v335 = vperm.slane %v223, 3
    %v336 = vperm.slane %v224, 3
    %v337 = vmul.f32 %v327, %v333
    %v338 = vmul.f32 %v327, %v334
    %v339 = vmul.f32 %v327, %v335
    %v340 = vmul.f32 %v327, %v336
    %v341 = vmul.f32 %v331, %v333
    %v342 = vmul.f32 %v331, %v334
    %v343 = vmul.f32 %v331, %v335
    %v344 = vmul.f32 %v331, %v336
    %v345 = vadd.f32 %v317, %v337
    %v346 = vadd.f32 %v318, %v338
    %v347 = vadd.f32 %v319, %v339
    %v348 = vadd.f32 %v320, %v340
    %v349 = vadd.f32 %v321, %v341
    %v350 = vadd.f32 %v322, %v342
    %v351 = vadd.f32 %v323, %v343
    %v352 = vadd.f32 %v324, %v344
    %353 = vset.pattern.permute.xlu0 4
    %354 = vperm.xlu0 %353, %v31
    %v355 = vpop.permute.xlu0 %354
    %357 = vset.pattern.permute.xlu0 4
    %358 = vperm.xlu0 %357, %v32
    %v359 = vpop.permute.xlu0 %358
    %v361 = vperm.slane %v221, 4
    %v362 = vperm.slane %v222, 4
    %v363 = vperm.slane %v223, 4
    %v364 = vperm.slane %v224, 4
    %v365 = vmul.f32 %v355, %v361
    %v366 = vmul.f32 %v355, %v362
    %v367 = vmul.f32 %v355, %v363
    %v368 = vmul.f32 %v355, %v364
    %v369 = vmul.f32 %v359, %v361
    %v370 = vmul.f32 %v359, %v362
    %v371 = vmul.f32 %v359, %v363
    %v372 = vmul.f32 %v359, %v364
    %v373 = vadd.f32 %v345, %v365
    %v374 = vadd.f32 %v346, %v366
    %v375 = vadd.f32 %v347, %v367
    %v376 = vadd.f32 %v348, %v368
    %v377 = vadd.f32 %v349, %v369
    %v378 = vadd.f32 %v350, %v370
    %v379 = vadd.f32 %v351, %v371
    %v380 = vadd.f32 %v352, %v372
    %381 = vset.pattern.permute.xlu0 5
    %382 = vperm.xlu0 %381, %v31
    %v383 = vpop.permute.xlu0 %382
    %385 = vset.pattern.permute.xlu0 5
    %386 = vperm.xlu0 %385, %v32
    %v387 = vpop.permute.xlu0 %386
    %v389 = vperm.slane %v221, 5
    %v390 = vperm.slane %v222, 5
    %v391 = vperm.slane %v223, 5
    %v392 = vperm.slane %v224, 5
    %v393 = vmul.f32 %v383, %v389
    %v394 = vmul.f32 %v383, %v390
    %v395 = vmul.f32 %v383, %v391
    %v396 = vmul.f32 %v383, %v392
    %v397 = vmul.f32 %v387, %v389
    %v398 = vmul.f32 %v387, %v390
    %v399 = vmul.f32 %v387, %v391
    %v400 = vmul.f32 %v387, %v392
    %v401 = vadd.f32 %v373, %v393
    %v402 = vadd.f32 %v374, %v394
    %v403 = vadd.f32 %v375, %v395
    %v404 = vadd.f32 %v376, %v396
    %v405 = vadd.f32 %v377, %v397
    %v406 = vadd.f32 %v378, %v398
    %v407 = vadd.f32 %v379, %v399
    %v408 = vadd.f32 %v380, %v400
    %409 = vset.pattern.permute.xlu0 6
    %410 = vperm.xlu0 %409, %v31
    %v411 = vpop.permute.xlu0 %410
    %413 = vset.pattern.permute.xlu0 6
    %414 = vperm.xlu0 %413, %v32
    %v415 = vpop.permute.xlu0 %414
    %v417 = vperm.slane %v221, 6
    %v418 = vperm.slane %v222, 6
    %v419 = vperm.slane %v223, 6
    %v420 = vperm.slane %v224, 6
    %v421 = vmul.f32 %v411, %v417
    %v422 = vmul.f32 %v411, %v418
    %v423 = vmul.f32 %v411, %v419
    %v424 = vmul.f32 %v411, %v420
    %v425 = vmul.f32 %v415, %v417
    %v426 = vmul.f32 %v415, %v418
    %v427 = vmul.f32 %v415, %v419
    %v428 = vmul.f32 %v415, %v420
    %v429 = vadd.f32 %v401, %v421
    %v430 = vadd.f32 %v402, %v422
    %v431 = vadd.f32 %v403, %v423
    %v432 = vadd.f32 %v404, %v424
    %v433 = vadd.f32 %v405, %v425
    %v434 = vadd.f32 %v406, %v426
    %v435 = vadd.f32 %v407, %v427
    %v436 = vadd.f32 %v408, %v428
    %437 = vset.pattern.permute.xlu0 7
    %438 = vperm.xlu0 %437, %v31
    %v439 = vpop.permute.xlu0 %438
    %441 = vset.pattern.permute.xlu0 7
    %442 = vperm.xlu0 %441, %v32
    %v443 = vpop.permute.xlu0 %442
    %v445 = vperm.slane %v221, 7
    %v446 = vperm.slane %v222, 7
    %v447 = vperm.slane %v223, 7
    %v448 = vperm.slane %v224, 7
    %v449 = vmul.f32 %v439, %v445
    %v450 = vmul.f32 %v439, %v446
    %v451 = vmul.f32 %v439, %v447
    %v452 = vmul.f32 %v439, %v448
    %v453 = vmul.f32 %v443, %v445
    %v454 = vmul.f32 %v443, %v446
    %v455 = vmul.f32 %v443, %v447
    %v456 = vmul.f32 %v443, %v448
    %v457 = vadd.f32 %v429, %v449
    %v458 = vadd.f32 %v430, %v450
    %v459 = vadd.f32 %v431, %v451
    %v460 = vadd.f32 %v432, %v452
    %v461 = vadd.f32 %v433, %v453
    %v462 = vadd.f32 %v434, %v454
    %v463 = vadd.f32 %v435, %v455
    %v464 = vadd.f32 %v436, %v456
    %465 = vset.pattern.permute.xlu0 8
    %466 = vperm.xlu0 %465, %v31
    %v467 = vpop.permute.xlu0 %466
    %469 = vset.pattern.permute.xlu0 8
    %470 = vperm.xlu0 %469, %v32
    %v471 = vpop.permute.xlu0 %470
    %v473 = vperm.slane %v225, 0
    %v474 = vperm.slane %v226, 0
    %v475 = vperm.slane %v227, 0
    %v476 = vperm.slane %v228, 0
    %v477 = vmul.f32 %v467, %v473
    %v478 = vmul.f32 %v467, %v474
    %v479 = vmul.f32 %v467, %v475
    %v480 = vmul.f32 %v467, %v476
    %v481 = vmul.f32 %v471, %v473
    %v482 = vmul.f32 %v471, %v474
    %v483 = vmul.f32 %v471, %v475
    %v484 = vmul.f32 %v471, %v476
    %v485 = vadd.f32 %v457, %v477
    %v486 = vadd.f32 %v458, %v478
    %v487 = vadd.f32 %v459, %v479
    %v488 = vadd.f32 %v460, %v480
    %v489 = vadd.f32 %v461, %v481
    %v490 = vadd.f32 %v462, %v482
    %v491 = vadd.f32 %v463, %v483
    %v492 = vadd.f32 %v464, %v484
    %493 = vset.pattern.permute.xlu0 9
    %494 = vperm.xlu0 %493, %v31
    %v495 = vpop.permute.xlu0 %494
    %497 = vset.pattern.permute.xlu0 9
    %498 = vperm.xlu0 %497, %v32
    %v499 = vpop.permute.xlu0 %498
    %v501 = vperm.slane %v225, 1
    %v502 = vperm.slane %v226, 1
    %v503 = vperm.slane %v227, 1
    %v504 = vperm.slane %v228, 1
    %v505 = vmul.f32 %v495, %v501
    %v506 = vmul.f32 %v495, %v502
    %v507 = vmul.f32 %v495, %v503
    %v508 = vmul.f32 %v495, %v504
    %v509 = vmul.f32 %v499, %v501
    %v510 = vmul.f32 %v499, %v502
    %v511 = vmul.f32 %v499, %v503
    %v512 = vmul.f32 %v499, %v504
    %v513 = vadd.f32 %v485, %v505
    %v514 = vadd.f32 %v486, %v506
    %v515 = vadd.f32 %v487, %v507
    %v516 = vadd.f32 %v488, %v508
    %v517 = vadd.f32 %v489, %v509
    %v518 = vadd.f32 %v490, %v510
    %v519 = vadd.f32 %v491, %v511
    %v520 = vadd.f32 %v492, %v512
    %521 = vset.pattern.permute.xlu0 10
    %522 = vperm.xlu0 %521, %v31
    %v523 = vpop.permute.xlu0 %522
    %525 = vset.pattern.permute.xlu0 10
    %526 = vperm.xlu0 %525, %v32
    %v527 = vpop.permute.xlu0 %526
    %v529 = vperm.slane %v225, 2
    %v530 = vperm.slane %v226, 2
    %v531 = vperm.slane %v227, 2
    %v532 = vperm.slane %v228, 2
    %v533 = vmul.f32 %v523, %v529
    %v534 = vmul.f32 %v523, %v530
    %v535 = vmul.f32 %v523, %v531
    %v536 = vmul.f32 %v523, %v532
    %v537 = vmul.f32 %v527, %v529
    %v538 = vmul.f32 %v527, %v530
    %v539 = vmul.f32 %v527, %v531
    %v540 = vmul.f32 %v527, %v532
    %v541 = vadd.f32 %v513, %v533
    %v542 = vadd.f32 %v514, %v534
    %v543 = vadd.f32 %v515, %v535
    %v544 = vadd.f32 %v516, %v536
    %v545 = vadd.f32 %v517, %v537
    %v546 = vadd.f32 %v518, %v538
    %v547 = vadd.f32 %v519, %v539
    %v548 = vadd.f32 %v520, %v540
    %549 = vset.pattern.permute.xlu0 11
    %550 = vperm.xlu0 %549, %v31
    %v551 = vpop.permute.xlu0 %550
    %553 = vset.pattern.permute.xlu0 11
    %554 = vperm.xlu0 %553, %v32
    %v555 = vpop.permute.xlu0 %554
    %v557 = vperm.slane %v225, 3
    %v558 = vperm.slane %v226, 3
    %v559 = vperm.slane %v227, 3
    %v560 = vperm.slane %v228, 3
    %v561 = vmul.f32 %v551, %v557
    %v562 = vmul.f32 %v551, %v558
    %v563 = vmul.f32 %v551, %v559
    %v564 = vmul.f32 %v551, %v560
    %v565 = vmul.f32 %v555, %v557
    %v566 = vmul.f32 %v555, %v558
    %v567 = vmul.f32 %v555, %v559
    %v568 = vmul.f32 %v555, %v560
    %v569 = vadd.f32 %v541, %v561
    %v570 = vadd.f32 %v542, %v562
    %v571 = vadd.f32 %v543, %v563
    %v572 = vadd.f32 %v544, %v564
    %v573 = vadd.f32 %v545, %v565
    %v574 = vadd.f32 %v546, %v566
    %v575 = vadd.f32 %v547, %v567
    %v576 = vadd.f32 %v548, %v568
    %577 = vset.pattern.permute.xlu0 12
    %578 = vperm.xlu0 %577, %v31
    %v579 = vpop.permute.xlu0 %578
    %581 = vset.pattern.permute.xlu0 12
    %582 = vperm.xlu0 %581, %v32
    %v583 = vpop.permute.xlu0 %582
    %v585 = vperm.slane %v225, 4
    %v586 = vperm.slane %v226, 4
    %v587 = vperm.slane %v227, 4
    %v588 = vperm.slane %v228, 4
    %v589 = vmul.f32 %v579, %v585
    %v590 = vmul.f32 %v579, %v586
    %v591 = vmul.f32 %v579, %v587
    %v592 = vmul.f32 %v579, %v588
    %v593 = vmul.f32 %v583, %v585
    %v594 = vmul.f32 %v583, %v586
    %v595 = vmul.f32 %v583, %v587
    %v596 = vmul.f32 %v583, %v588
    %v597 = vadd.f32 %v569, %v589
    %v598 = vadd.f32 %v570, %v590
    %v599 = vadd.f32 %v571, %v591
    %v600 = vadd.f32 %v572, %v592
    %v601 = vadd.f32 %v573, %v593
    %v602 = vadd.f32 %v574, %v594
    %v603 = vadd.f32 %v575, %v595
    %v604 = vadd.f32 %v576, %v596
    %605 = vset.pattern.permute.xlu0 13
    %606 = vperm.xlu0 %605, %v31
    %v607 = vpop.permute.xlu0 %606
    %609 = vset.pattern.permute.xlu0 13
    %610 = vperm.xlu0 %609, %v32
    %v611 = vpop.permute.xlu0 %610
    %v613 = vperm.slane %v225, 5
    %v614 = vperm.slane %v226, 5
    %v615 = vperm.slane %v227, 5
    %v616 = vperm.slane %v228, 5
    %v617 = vmul.f32 %v607, %v613
    %v618 = vmul.f32 %v607, %v614
    %v619 = vmul.f32 %v607, %v615
    %v620 = vmul.f32 %v607, %v616
    %v621 = vmul.f32 %v611, %v613
    %v622 = vmul.f32 %v611, %v614
    %v623 = vmul.f32 %v611, %v615
    %v624 = vmul.f32 %v611, %v616
    %v625 = vadd.f32 %v597, %v617
    %v626 = vadd.f32 %v598, %v618
    %v627 = vadd.f32 %v599, %v619
    %v628 = vadd.f32 %v600, %v620
    %v629 = vadd.f32 %v601, %v621
    %v630 = vadd.f32 %v602, %v622
    %v631 = vadd.f32 %v603, %v623
    %v632 = vadd.f32 %v604, %v624
    %633 = vset.pattern.permute.xlu0 14
    %634 = vperm.xlu0 %633, %v31
    %v635 = vpop.permute.xlu0 %634
    %637 = vset.pattern.permute.xlu0 14
    %638 = vperm.xlu0 %637, %v32
    %v639 = vpop.permute.xlu0 %638
    %v641 = vperm.slane %v225, 6
    %v642 = vperm.slane %v226, 6
    %v643 = vperm.slane %v227, 6
    %v644 = vperm.slane %v228, 6
    %v645 = vmul.f32 %v635, %v641
    %v646 = vmul.f32 %v635, %v642
    %v647 = vmul.f32 %v635, %v643
    %v648 = vmul.f32 %v635, %v644
    %v649 = vmul.f32 %v639, %v641
    %v650 = vmul.f32 %v639, %v642
    %v651 = vmul.f32 %v639, %v643
    %v652 = vmul.f32 %v639, %v644
    %v653 = vadd.f32 %v625, %v645
    %v654 = vadd.f32 %v626, %v646
    %v655 = vadd.f32 %v627, %v647
    %v656 = vadd.f32 %v628, %v648
    %v657 = vadd.f32 %v629, %v649
    %v658 = vadd.f32 %v630, %v650
    %v659 = vadd.f32 %v631, %v651
    %v660 = vadd.f32 %v632, %v652
    %661 = vset.pattern.permute.xlu0 15
    %662 = vperm.xlu0 %661, %v31
    %v663 = vpop.permute.xlu0 %662
    %665 = vset.pattern.permute.xlu0 15
    %666 = vperm.xlu0 %665, %v32
    %v667 = vpop.permute.xlu0 %666
    %v669 = vperm.slane %v225, 7
    %v670 = vperm.slane %v226, 7
    %v671 = vperm.slane %v227, 7
    %v672 = vperm.slane %v228, 7
    %v673 = vmul.f32 %v663, %v669
    %v674 = vmul.f32 %v663, %v670
    %v675 = vmul.f32 %v663, %v671
    %v676 = vmul.f32 %v663, %v672
    %v677 = vmul.f32 %v667, %v669
    %v678 = vmul.f32 %v667, %v670
    %v679 = vmul.f32 %v667, %v671
    %v680 = vmul.f32 %v667, %v672
    %v681 = vadd.f32 %v653, %v673
    %v682 = vadd.f32 %v654, %v674
    %v683 = vadd.f32 %v655, %v675
    %v684 = vadd.f32 %v656, %v676
    %v685 = vadd.f32 %v657, %v677
    %v686 = vadd.f32 %v658, %v678
    %v687 = vadd.f32 %v659, %v679
    %v688 = vadd.f32 %v660, %v680
    %v689 = vmax.f32 %v681, 0.0
    %v690 = vmax.f32 %v682, 0.0
    %v691 = vmax.f32 %v683, 0.0
    %v692 = vmax.f32 %v684, 0.0
    %v693 = vmax.f32 %v685, 0.0
    %v694 = vmax.f32 %v686, 0.0
    %v695 = vmax.f32 %v687, 0.0
    %v696 = vmax.f32 %v688, 0.0
    %698 = vset.pattern.permute.xlu0 0
    %699 = vperm.xlu0 %698, %v35
    %v700 = vpop.permute.xlu0 %699
    %v702 = vperm.slane %v689, 0
    %v703 = vperm.slane %v690, 0
    %v704 = vperm.slane %v691, 0
    %v705 = vperm.slane %v692, 0
    %v706 = vmul.f32 %v700, %v702
    %v707 = vmul.f32 %v700, %v703
    %v708 = vmul.f32 %v700, %v704
    %v709 = vmul.f32 %v700, %v705
    %711 = vset.pattern.permute.xlu0 0
    %712 = vperm.xlu0 %711, %v36
    %v713 = vpop.permute.xlu0 %712
    %v715 = vadd.f32 %v706, %v713
    %v716 = vadd.f32 %v707, %v713
    %v717 = vadd.f32 %v708, %v713
    %v718 = vadd.f32 %v709, %v713
    %719 = vset.pattern.permute.xlu0 1
    %720 = vperm.xlu0 %719, %v35
    %v721 = vpop.permute.xlu0 %720
    %v723 = vperm.slane %v689, 1
    %v724 = vperm.slane %v690, 1
    %v725 = vperm.slane %v691, 1
    %v726 = vperm.slane %v692, 1
    %v727 = vmul.f32 %v721, %v723
    %v728 = vmul.f32 %v721, %v724
    %v729 = vmul.f32 %v721, %v725
    %v730 = vmul.f32 %v721, %v726
    %v731 = vadd.f32 %v715, %v727
    %v732 = vadd.f32 %v716, %v728
    %v733 = vadd.f32 %v717, %v729
    %v734 = vadd.f32 %v718, %v730
    %735 = vset.pattern.permute.xlu0 2
    %736 = vperm.xlu0 %735, %v35
    %v737 = vpop.permute.xlu0 %736
    %v739 = vperm.slane %v689, 2
    %v740 = vperm.slane %v690, 2
    %v741 = vperm.slane %v691, 2
    %v742 = vperm.slane %v692, 2
    %v743 = vmul.f32 %v737, %v739
    %v744 = vmul.f32 %v737, %v740
    %v745 = vmul.f32 %v737, %v741
    %v746 = vmul.f32 %v737, %v742
    %v747 = vadd.f32 %v731, %v743
    %v748 = vadd.f32 %v732, %v744
    %v749 = vadd.f32 %v733, %v745
    %v750 = vadd.f32 %v734, %v746
    %751 = vset.pattern.permute.xlu0 3
    %752 = vperm.xlu0 %751, %v35
    %v753 = vpop.permute.xlu0 %752
    %v755 = vperm.slane %v689, 3
    %v756 = vperm.slane %v690, 3
    %v757 = vperm.slane %v691, 3
    %v758 = vperm.slane %v692, 3
    %v759 = vmul.f32 %v753, %v755
    %v760 = vmul.f32 %v753, %v756
    %v761 = vmul.f32 %v753, %v757
    %v762 = vmul.f32 %v753, %v758
    %v763 = vadd.f32 %v747, %v759
    %v764 = vadd.f32 %v748, %v760
    %v765 = vadd.f32 %v749, %v761
    %v766 = vadd.f32 %v750, %v762
    %767 = vset.pattern.permute.xlu0 4
    %768 = vperm.xlu0 %767, %v35
    %v769 = vpop.permute.xlu0 %768
    %v771 = vperm.slane %v689, 4
    %v772 = vperm.slane %v690, 4
    %v773 = vperm.slane %v691, 4
    %v774 = vperm.slane %v692, 4
    %v775 = vmul.f32 %v769, %v771
    %v776 = vmul.f32 %v769, %v772
    %v777 = vmul.f32 %v769, %v773
    %v778 = vmul.f32 %v769, %v774
    %v779 = vadd.f32 %v763, %v775
    %v780 = vadd.f32 %v764, %v776
    %v781 = vadd.f32 %v765, %v777
    %v782 = vadd.f32 %v766, %v778
    %783 = vset.pattern.permute.xlu0 5
    %784 = vperm.xlu0 %783, %v35
    %v785 = vpop.permute.xlu0 %784
    %v787 = vperm.slane %v689, 5
    %v788 = vperm.slane %v690, 5
    %v789 = vperm.slane %v691, 5
    %v790 = vperm.slane %v692, 5
    %v791 = vmul.f32 %v785, %v787
    %v792 = vmul.f32 %v785, %v788
    %v793 = vmul.f32 %v785, %v789
    %v794 = vmul.f32 %v785, %v790
    %v795 = vadd.f32 %v779, %v791
    %v796 = vadd.f32 %v780, %v792
    %v797 = vadd.f32 %v781, %v793
    %v798 = vadd.f32 %v782, %v794
    %799 = vset.pattern.permute.xlu0 6
    %800 = vperm.xlu0 %799, %v35
    %v801 = vpop.permute.xlu0 %800
    %v803 = vperm.slane %v689, 6
    %v804 = vperm.slane %v690, 6
    %v805 = vperm.slane %v691, 6
    %v806 = vperm.slane %v692, 6
    %v807 = vmul.f32 %v801, %v803
    %v808 = vmul.f32 %v801, %v804
    %v809 = vmul.f32 %v801, %v805
    %v810 = vmul.f32 %v801, %v806
    %v811 = vadd.f32 %v795, %v807
    %v812 = vadd.f32 %v796, %v808
    %v813 = vadd.f32 %v797, %v809
    %v814 = vadd.f32 %v798, %v810
    %815 = vset.pattern.permute.xlu0 7
    %816 = vperm.xlu0 %815, %v35
    %v817 = vpop.permute.xlu0 %816
    %v819 = vperm.slane %v689, 7
    %v820 = vperm.slane %v690, 7
    %v821 = vperm.slane %v691, 7
    %v822 = vperm.slane %v692, 7
    %v823 = vmul.f32 %v817, %v819
    %v824 = vmul.f32 %v817, %v820
    %v825 = vmul.f32 %v817, %v821
    %v826 = vmul.f32 %v817, %v822
    %v827 = vadd.f32 %v811, %v823
    %v828 = vadd.f32 %v812, %v824
    %v829 = vadd.f32 %v813, %v825
    %v830 = vadd.f32 %v814, %v826
    %831 = vset.pattern.permute.xlu0 8
    %832 = vperm.xlu0 %831, %v35
    %v833 = vpop.permute.xlu0 %832
    %v835 = vperm.slane %v693, 0
    %v836 = vperm.slane %v694, 0
    %v837 = vperm.slane %v695, 0
    %v838 = vperm.slane %v696, 0
    %v839 = vmul.f32 %v833, %v835
    %v840 = vmul.f32 %v833, %v836
    %v841 = vmul.f32 %v833, %v837
    %v842 = vmul.f32 %v833, %v838
    %v843 = vadd.f32 %v827, %v839
    %v844 = vadd.f32 %v828, %v840
    %v845 = vadd.f32 %v829, %v841
    %v846 = vadd.f32 %v830, %v842
    %847 = vset.pattern.permute.xlu0 9
    %848 = vperm.xlu0 %847, %v35
    %v849 = vpop.permute.xlu0 %848
    %v851 = vperm.slane %v693, 1
    %v852 = vperm.slane %v694, 1
    %v853 = vperm.slane %v695, 1
    %v854 = vperm.slane %v696, 1
    %v855 = vmul.f32 %v849, %v851
    %v856 = vmul.f32 %v849, %v852
    %v857 = vmul.f32 %v849, %v853
    %v858 = vmul.f32 %v849, %v854
    %v859 = vadd.f32 %v843, %v855
    %v860 = vadd.f32 %v844, %v856
    %v861 = vadd.f32 %v845, %v857
    %v862 = vadd.f32 %v846, %v858
    %863 = vset.pattern.permute.xlu0 10
    %864 = vperm.xlu0 %863, %v35
    %v865 = vpop.permute.xlu0 %864
    %v867 = vperm.slane %v693, 2
    %v868 = vperm.slane %v694, 2
    %v869 = vperm.slane %v695, 2
    %v870 = vperm.slane %v696, 2
    %v871 = vmul.f32 %v865, %v867
    %v872 = vmul.f32 %v865, %v868
    %v873 = vmul.f32 %v865, %v869
    %v874 = vmul.f32 %v865, %v870
    %v875 = vadd.f32 %v859, %v871
    %v876 = vadd.f32 %v860, %v872
    %v877 = vadd.f32 %v861, %v873
    %v878 = vadd.f32 %v862, %v874
    %879 = vset.pattern.permute.xlu0 11
    %880 = vperm.xlu0 %879, %v35
    %v881 = vpop.permute.xlu0 %880
    %v883 = vperm.slane %v693, 3
    %v884 = vperm.slane %v694, 3
    %v885 = vperm.slane %v695, 3
    %v886 = vperm.slane %v696, 3
    %v887 = vmul.f32 %v881, %v883
    %v888 = vmul.f32 %v881, %v884
    %v889 = vmul.f32 %v881, %v885
    %v890 = vmul.f32 %v881, %v886
    %v891 = vadd.f32 %v875, %v887
    %v892 = vadd.f32 %v876, %v888
    %v893 = vadd.f32 %v877, %v889
    %v894 = vadd.f32 %v878, %v890
    %895 = vset.pattern.permute.xlu0 12
    %896 = vperm.xlu0 %895, %v35
    %v897 = vpop.permute.xlu0 %896
    %v899 = vperm.slane %v693, 4
    %v900 = vperm.slane %v694, 4
    %v901 = vperm.slane %v695, 4
    %v902 = vperm.slane %v696, 4
    %v903 = vmul.f32 %v897, %v899
    %v904 = vmul.f32 %v897, %v900
    %v905 = vmul.f32 %v897, %v901
    %v906 = vmul.f32 %v897, %v902
    %v907 = vadd.f32 %v891, %v903
    %v908 = vadd.f32 %v892, %v904
    %v909 = vadd.f32 %v893, %v905
    %v910 = vadd.f32 %v894, %v906
    %911 = vset.pattern.permute.xlu0 13
    %912 = vperm.xlu0 %911, %v35
    %v913 = vpop.permute.xlu0 %912
    %v915 = vperm.slane %v693, 5
    %v916 = vperm.slane %v694, 5
    %v917 = vperm.slane %v695, 5
    %v918 = vperm.slane %v696, 5
    %v919 = vmul.f32 %v913, %v915
    %v920 = vmul.f32 %v913, %v916
    %v921 = vmul.f32 %v913, %v917
    %v922 = vmul.f32 %v913, %v918
    %v923 = vadd.f32 %v907, %v919
    %v924 = vadd.f32 %v908, %v920
    %v925 = vadd.f32 %v909, %v921
    %v926 = vadd.f32 %v910, %v922
    %927 = vset.pattern.permute.xlu0 14
    %928 = vperm.xlu0 %927, %v35
    %v929 = vpop.permute.xlu0 %928
    %v931 = vperm.slane %v693, 6
    %v932 = vperm.slane %v694, 6
    %v933 = vperm.slane %v695, 6
    %v934 = vperm.slane %v696, 6
    %v935 = vmul.f32 %v929, %v931
    %v936 = vmul.f32 %v929, %v932
    %v937 = vmul.f32 %v929, %v933
    %v938 = vmul.f32 %v929, %v934
    %v939 = vadd.f32 %v923, %v935
    %v940 = vadd.f32 %v924, %v936
    %v941 = vadd.f32 %v925, %v937
    %v942 = vadd.f32 %v926, %v938
    %943 = vset.pattern.permute.xlu0 15
    %944 = vperm.xlu0 %943, %v35
    %v945 = vpop.permute.xlu0 %944
    %v947 = vperm.slane %v693, 7
    %v948 = vperm.slane %v694, 7
    %v949 = vperm.slane %v695, 7
    %v950 = vperm.slane %v696, 7
    %v951 = vmul.f32 %v945, %v947
    %v952 = vmul.f32 %v945, %v948
    %v953 = vmul.f32 %v945, %v949
    %v954 = vmul.f32 %v945, %v950
    %v955 = vadd.f32 %v939, %v951
    %v956 = vadd.f32 %v940, %v952
    %v957 = vadd.f32 %v941, %v953
    %v958 = vadd.f32 %v942, %v954
    %v963 = vrot.slane %v956, 4
    %v964 = vrot.slane %v958, 4
    %vm965 = vcmask 1043456
    %v966 = vsel %vm965, %v955, %v963
    %v967 = vsel %vm965, %v957, %v964
    %970 = vst [vmem:[#allocation2] sm:$0xff] %v966
    %971 = vst [vmem:[#allocation2 + $0x8] sm:$0xff] %v967
    %s972 = scalar_lea.vmem %s0, 32
    %v973 = vld [vmem:[%s972] sm:$0x3f]
    %v974 = vld [vmem:[%s972 + $0x8] sm:$0x3f]
    %v975 = vld [vmem:[%s972 + $0x10] sm:$0x3f]
    %v976 = vld [vmem:[%s972 + $0x18] sm:$0x3f]
    %v977 = vperm.slane %v973, 0
    %v978 = vperm.slane %v974, 0
    %v979 = vperm.slane %v975, 0
    %v980 = vperm.slane %v976, 0
    %v981 = vmul.f32 %v44, %v977
    %v982 = vmul.f32 %v44, %v978
    %v983 = vmul.f32 %v44, %v979
    %v984 = vmul.f32 %v44, %v980
    %v985 = vmul.f32 %v49, %v977
    %v986 = vmul.f32 %v49, %v978
    %v987 = vmul.f32 %v49, %v979
    %v988 = vmul.f32 %v49, %v980
    %v989 = vadd.f32 %v981, %v66
    %v990 = vadd.f32 %v982, %v66
    %v991 = vadd.f32 %v983, %v66
    %v992 = vadd.f32 %v984, %v66
    %v993 = vadd.f32 %v985, %v71
    %v994 = vadd.f32 %v986, %v71
    %v995 = vadd.f32 %v987, %v71
    %v996 = vadd.f32 %v988, %v71
    %v997 = vperm.slane %v973, 1
    %v998 = vperm.slane %v974, 1
    %v999 = vperm.slane %v975, 1
    %v1000 = vperm.slane %v976, 1
    %v1001 = vmul.f32 %v83, %v997
    %v1002 = vmul.f32 %v83, %v998
    %v1003 = vmul.f32 %v83, %v999
    %v1004 = vmul.f32 %v83, %v1000
    %v1005 = vmul.f32 %v87, %v997
    %v1006 = vmul.f32 %v87, %v998
    %v1007 = vmul.f32 %v87, %v999
    %v1008 = vmul.f32 %v87, %v1000
    %v1009 = vadd.f32 %v989, %v1001
    %v1010 = vadd.f32 %v990, %v1002
    %v1011 = vadd.f32 %v991, %v1003
    %v1012 = vadd.f32 %v992, %v1004
    %v1013 = vadd.f32 %v993, %v1005
    %v1014 = vadd.f32 %v994, %v1006
    %v1015 = vadd.f32 %v995, %v1007
    %v1016 = vadd.f32 %v996, %v1008
    %v1017 = vperm.slane %v973, 2
    %v1018 = vperm.slane %v974, 2
    %v1019 = vperm.slane %v975, 2
    %v1020 = vperm.slane %v976, 2
    %v1021 = vmul.f32 %v111, %v1017
    %v1022 = vmul.f32 %v111, %v1018
    %v1023 = vmul.f32 %v111, %v1019
    %v1024 = vmul.f32 %v111, %v1020
    %v1025 = vmul.f32 %v115, %v1017
    %v1026 = vmul.f32 %v115, %v1018
    %v1027 = vmul.f32 %v115, %v1019
    %v1028 = vmul.f32 %v115, %v1020
    %v1029 = vadd.f32 %v1009, %v1021
    %v1030 = vadd.f32 %v1010, %v1022
    %v1031 = vadd.f32 %v1011, %v1023
    %v1032 = vadd.f32 %v1012, %v1024
    %v1033 = vadd.f32 %v1013, %v1025
    %v1034 = vadd.f32 %v1014, %v1026
    %v1035 = vadd.f32 %v1015, %v1027
    %v1036 = vadd.f32 %v1016, %v1028
    %v1037 = vperm.slane %v973, 3
    %v1038 = vperm.slane %v974, 3
    %v1039 = vperm.slane %v975, 3
    %v1040 = vperm.slane %v976, 3
    %v1041 = vmul.f32 %v139, %v1037
    %v1042 = vmul.f32 %v139, %v1038
    %v1043 = vmul.f32 %v139, %v1039
    %v1044 = vmul.f32 %v139, %v1040
    %v1045 = vmul.f32 %v143, %v1037
    %v1046 = vmul.f32 %v143, %v1038
    %v1047 = vmul.f32 %v143, %v1039
    %v1048 = vmul.f32 %v143, %v1040
    %v1049 = vadd.f32 %v1029, %v1041
    %v1050 = vadd.f32 %v1030, %v1042
    %v1051 = vadd.f32 %v1031, %v1043
    %v1052 = vadd.f32 %v1032, %v1044
    %v1053 = vadd.f32 %v1033, %v1045
    %v1054 = vadd.f32 %v1034, %v1046
    %v1055 = vadd.f32 %v1035, %v1047
    %v1056 = vadd.f32 %v1036, %v1048
    %v1057 = vperm.slane %v973, 4
    %v1058 = vperm.slane %v974, 4
    %v1059 = vperm.slane %v975, 4
    %v1060 = vperm.slane %v976, 4
    %v1061 = vmul.f32 %v167, %v1057
    %v1062 = vmul.f32 %v167, %v1058
    %v1063 = vmul.f32 %v167, %v1059
    %v1064 = vmul.f32 %v167, %v1060
    %v1065 = vmul.f32 %v171, %v1057
    %v1066 = vmul.f32 %v171, %v1058
    %v1067 = vmul.f32 %v171, %v1059
    %v1068 = vmul.f32 %v171, %v1060
    %v1069 = vadd.f32 %v1049, %v1061
    %v1070 = vadd.f32 %v1050, %v1062
    %v1071 = vadd.f32 %v1051, %v1063
    %v1072 = vadd.f32 %v1052, %v1064
    %v1073 = vadd.f32 %v1053, %v1065
    %v1074 = vadd.f32 %v1054, %v1066
    %v1075 = vadd.f32 %v1055, %v1067
    %v1076 = vadd.f32 %v1056, %v1068
    %v1077 = vperm.slane %v973, 5
    %v1078 = vperm.slane %v974, 5
    %v1079 = vperm.slane %v975, 5
    %v1080 = vperm.slane %v976, 5
    %v1081 = vmul.f32 %v195, %v1077
    %v1082 = vmul.f32 %v195, %v1078
    %v1083 = vmul.f32 %v195, %v1079
    %v1084 = vmul.f32 %v195, %v1080
    %v1085 = vmul.f32 %v199, %v1077
    %v1086 = vmul.f32 %v199, %v1078
    %v1087 = vmul.f32 %v199, %v1079
    %v1088 = vmul.f32 %v199, %v1080
    %v1089 = vadd.f32 %v1069, %v1081
    %v1090 = vadd.f32 %v1070, %v1082
    %v1091 = vadd.f32 %v1071, %v1083
    %v1092 = vadd.f32 %v1072, %v1084
    %v1093 = vadd.f32 %v1073, %v1085
    %v1094 = vadd.f32 %v1074, %v1086
    %v1095 = vadd.f32 %v1075, %v1087
    %v1096 = vadd.f32 %v1076, %v1088
    %v1097 = vmax.f32 %v1089, 0.0
    %v1098 = vmax.f32 %v1090, 0.0
    %v1099 = vmax.f32 %v1091, 0.0
    %v1100 = vmax.f32 %v1092, 0.0
    %v1101 = vmax.f32 %v1093, 0.0
    %v1102 = vmax.f32 %v1094, 0.0
    %v1103 = vmax.f32 %v1095, 0.0
    %v1104 = vmax.f32 %v1096, 0.0
    %v1105 = vperm.slane %v1097, 0
    %v1106 = vperm.slane %v1098, 0
    %v1107 = vperm.slane %v1099, 0
    %v1108 = vperm.slane %v1100, 0
    %v1109 = vmul.f32 %v232, %v1105
    %v1110 = vmul.f32 %v232, %v1106
    %v1111 = vmul.f32 %v232, %v1107
    %v1112 = vmul.f32 %v232, %v1108
    %v1113 = vmul.f32 %v237, %v1105
    %v1114 = vmul.f32 %v237, %v1106
    %v1115 = vmul.f32 %v237, %v1107
    %v1116 = vmul.f32 %v237, %v1108
    %v1117 = vadd.f32 %v1109, %v254
    %v1118 = vadd.f32 %v1110, %v254
    %v1119 = vadd.f32 %v1111, %v254
    %v1120 = vadd.f32 %v1112, %v254
    %v1121 = vadd.f32 %v1113, %v259
    %v1122 = vadd.f32 %v1114, %v259
    %v1123 = vadd.f32 %v1115, %v259
    %v1124 = vadd.f32 %v1116, %v259
    %v1125 = vperm.slane %v1097, 1
    %v1126 = vperm.slane %v1098, 1
    %v1127 = vperm.slane %v1099, 1
    %v1128 = vperm.slane %v1100, 1
    %v1129 = vmul.f32 %v271, %v1125
    %v1130 = vmul.f32 %v271, %v1126
    %v1131 = vmul.f32 %v271, %v1127
    %v1132 = vmul.f32 %v271, %v1128
    %v1133 = vmul.f32 %v275, %v1125
    %v1134 = vmul.f32 %v275, %v1126
    %v1135 = vmul.f32 %v275, %v1127
    %v1136 = vmul.f32 %v275, %v1128
    %v1137 = vadd.f32 %v1117, %v1129
    %v1138 = vadd.f32 %v1118, %v1130
    %v1139 = vadd.f32 %v1119, %v1131
    %v1140 = vadd.f32 %v1120, %v1132
    %v1141 = vadd.f32 %v1121, %v1133
    %v1142 = vadd.f32 %v1122, %v1134
    %v1143 = vadd.f32 %v1123, %v1135
    %v1144 = vadd.f32 %v1124, %v1136
    %v1145 = vperm.slane %v1097, 2
    %v1146 = vperm.slane %v1098, 2
    %v1147 = vperm.slane %v1099, 2
    %v1148 = vperm.slane %v1100, 2
    %v1149 = vmul.f32 %v299, %v1145
    %v1150 = vmul.f32 %v299, %v1146
    %v1151 = vmul.f32 %v299, %v1147
    %v1152 = vmul.f32 %v299, %v1148
    %v1153 = vmul.f32 %v303, %v1145
    %v1154 = vmul.f32 %v303, %v1146
    %v1155 = vmul.f32 %v303, %v1147
    %v1156 = vmul.f32 %v303, %v1148
    %v1157 = vadd.f32 %v1137, %v1149
    %v1158 = vadd.f32 %v1138, %v1150
    %v1159 = vadd.f32 %v1139, %v1151
    %v1160 = vadd.f32 %v1140, %v1152
    %v1161 = vadd.f32 %v1141, %v1153
    %v1162 = vadd.f32 %v1142, %v1154
    %v1163 = vadd.f32 %v1143, %v1155
    %v1164 = vadd.f32 %v1144, %v1156
    %v1165 = vperm.slane %v1097, 3
    %v1166 = vperm.slane %v1098, 3
    %v1167 = vperm.slane %v1099, 3
    %v1168 = vperm.slane %v1100, 3
    %v1169 = vmul.f32 %v327, %v1165
    %v1170 = vmul.f32 %v327, %v1166
    %v1171 = vmul.f32 %v327, %v1167
    %v1172 = vmul.f32 %v327, %v1168
    %v1173 = vmul.f32 %v331, %v1165
    %v1174 = vmul.f32 %v331, %v1166
    %v1175 = vmul.f32 %v331, %v1167
    %v1176 = vmul.f32 %v331, %v1168
    %v1177 = vadd.f32 %v1157, %v1169
    %v1178 = vadd.f32 %v1158, %v1170
    %v1179 = vadd.f32 %v1159, %v1171
    %v1180 = vadd.f32 %v1160, %v1172
    %v1181 = vadd.f32 %v1161, %v1173
    %v1182 = vadd.f32 %v1162, %v1174
    %v1183 = vadd.f32 %v1163, %v1175
    %v1184 = vadd.f32 %v1164, %v1176
    %v1185 = vperm.slane %v1097, 4
    %v1186 = vperm.slane %v1098, 4
    %v1187 = vperm.slane %v1099, 4
    %v1188 = vperm.slane %v1100, 4
    %v1189 = vmul.f32 %v355, %v1185
    %v1190 = vmul.f32 %v355, %v1186
    %v1191 = vmul.f32 %v355, %v1187
    %v1192 = vmul.f32 %v355, %v1188
    %v1193 = vmul.f32 %v359, %v1185
    %v1194 = vmul.f32 %v359, %v1186
    %v1195 = vmul.f32 %v359, %v1187
    %v1196 = vmul.f32 %v359, %v1188
    %v1197 = vadd.f32 %v1177, %v1189
    %v1198 = vadd.f32 %v1178, %v1190
    %v1199 = vadd.f32 %v1179, %v1191
    %v1200 = vadd.f32 %v1180, %v1192
    %v1201 = vadd.f32 %v1181, %v1193
    %v1202 = vadd.f32 %v1182, %v1194
    %v1203 = vadd.f32 %v1183, %v1195
    %v1204 = vadd.f32 %v1184, %v1196
    %v1205 = vperm.slane %v1097, 5
    %v1206 = vperm.slane %v1098, 5
    %v1207 = vperm.slane %v1099, 5
    %v1208 = vperm.slane %v1100, 5
    %v1209 = vmul.f32 %v383, %v1205
    %v1210 = vmul.f32 %v383, %v1206
    %v1211 = vmul.f32 %v383, %v1207
    %v1212 = vmul.f32 %v383, %v1208
    %v1213 = vmul.f32 %v387, %v1205
    %v1214 = vmul.f32 %v387, %v1206
    %v1215 = vmul.f32 %v387, %v1207
    %v1216 = vmul.f32 %v387, %v1208
    %v1217 = vadd.f32 %v1197, %v1209
    %v1218 = vadd.f32 %v1198, %v1210
    %v1219 = vadd.f32 %v1199, %v1211
    %v1220 = vadd.f32 %v1200, %v1212
    %v1221 = vadd.f32 %v1201, %v1213
    %v1222 = vadd.f32 %v1202, %v1214
    %v1223 = vadd.f32 %v1203, %v1215
    %v1224 = vadd.f32 %v1204, %v1216
    %v1225 = vperm.slane %v1097, 6
    %v1226 = vperm.slane %v1098, 6
    %v1227 = vperm.slane %v1099, 6
    %v1228 = vperm.slane %v1100, 6
    %v1229 = vmul.f32 %v411, %v1225
    %v1230 = vmul.f32 %v411, %v1226
    %v1231 = vmul.f32 %v411, %v1227
    %v1232 = vmul.f32 %v411, %v1228
    %v1233 = vmul.f32 %v415, %v1225
    %v1234 = vmul.f32 %v415, %v1226
    %v1235 = vmul.f32 %v415, %v1227
    %v1236 = vmul.f32 %v415, %v1228
    %v1237 = vadd.f32 %v1217, %v1229
    %v1238 = vadd.f32 %v1218, %v1230
    %v1239 = vadd.f32 %v1219, %v1231
    %v1240 = vadd.f32 %v1220, %v1232
    %v1241 = vadd.f32 %v1221, %v1233
    %v1242 = vadd.f32 %v1222, %v1234
    %v1243 = vadd.f32 %v1223, %v1235
    %v1244 = vadd.f32 %v1224, %v1236
    %v1245 = vperm.slane %v1097, 7
    %v1246 = vperm.slane %v1098, 7
    %v1247 = vperm.slane %v1099, 7
    %v1248 = vperm.slane %v1100, 7
    %v1249 = vmul.f32 %v439, %v1245
    %v1250 = vmul.f32 %v439, %v1246
    %v1251 = vmul.f32 %v439, %v1247
    %v1252 = vmul.f32 %v439, %v1248
    %v1253 = vmul.f32 %v443, %v1245
    %v1254 = vmul.f32 %v443, %v1246
    %v1255 = vmul.f32 %v443, %v1247
    %v1256 = vmul.f32 %v443, %v1248
    %v1257 = vadd.f32 %v1237, %v1249
    %v1258 = vadd.f32 %v1238, %v1250
    %v1259 = vadd.f32 %v1239, %v1251
    %v1260 = vadd.f32 %v1240, %v1252
    %v1261 = vadd.f32 %v1241, %v1253
    %v1262 = vadd.f32 %v1242, %v1254
    %v1263 = vadd.f32 %v1243, %v1255
    %v1264 = vadd.f32 %v1244, %v1256
    %v1265 = vperm.slane %v1101, 0
    %v1266 = vperm.slane %v1102, 0
    %v1267 = vperm.slane %v1103, 0
    %v1268 = vperm.slane %v1104, 0
    %v1269 = vmul.f32 %v467, %v1265
    %v1270 = vmul.f32 %v467, %v1266
    %v1271 = vmul.f32 %v467, %v1267
    %v1272 = vmul.f32 %v467, %v1268
    %v1273 = vmul.f32 %v471, %v1265
    %v1274 = vmul.f32 %v471, %v1266
    %v1275 = vmul.f32 %v471, %v1267
    %v1276 = vmul.f32 %v471, %v1268
    %v1277 = vadd.f32 %v1257, %v1269
    %v1278 = vadd.f32 %v1258, %v1270
    %v1279 = vadd.f32 %v1259, %v1271
    %v1280 = vadd.f32 %v1260, %v1272
    %v1281 = vadd.f32 %v1261, %v1273
    %v1282 = vadd.f32 %v1262, %v1274
    %v1283 = vadd.f32 %v1263, %v1275
    %v1284 = vadd.f32 %v1264, %v1276
    %v1285 = vperm.slane %v1101, 1
    %v1286 = vperm.slane %v1102, 1
    %v1287 = vperm.slane %v1103, 1
    %v1288 = vperm.slane %v1104, 1
    %v1289 = vmul.f32 %v495, %v1285
    %v1290 = vmul.f32 %v495, %v1286
    %v1291 = vmul.f32 %v495, %v1287
    %v1292 = vmul.f32 %v495, %v1288
    %v1293 = vmul.f32 %v499, %v1285
    %v1294 = vmul.f32 %v499, %v1286
    %v1295 = vmul.f32 %v499, %v1287
    %v1296 = vmul.f32 %v499, %v1288
    %v1297 = vadd.f32 %v1277, %v1289
    %v1298 = vadd.f32 %v1278, %v1290
    %v1299 = vadd.f32 %v1279, %v1291
    %v1300 = vadd.f32 %v1280, %v1292
    %v1301 = vadd.f32 %v1281, %v1293
    %v1302 = vadd.f32 %v1282, %v1294
    %v1303 = vadd.f32 %v1283, %v1295
    %v1304 = vadd.f32 %v1284, %v1296
    %v1305 = vperm.slane %v1101, 2
    %v1306 = vperm.slane %v1102, 2
    %v1307 = vperm.slane %v1103, 2
    %v1308 = vperm.slane %v1104, 2
    %v1309 = vmul.f32 %v523, %v1305
    %v1310 = vmul.f32 %v523, %v1306
    %v1311 = vmul.f32 %v523, %v1307
    %v1312 = vmul.f32 %v523, %v1308
    %v1313 = vmul.f32 %v527, %v1305
    %v1314 = vmul.f32 %v527, %v1306
    %v1315 = vmul.f32 %v527, %v1307
    %v1316 = vmul.f32 %v527, %v1308
    %v1317 = vadd.f32 %v1297, %v1309
    %v1318 = vadd.f32 %v1298, %v1310
    %v1319 = vadd.f32 %v1299, %v1311
    %v1320 = vadd.f32 %v1300, %v1312
    %v1321 = vadd.f32 %v1301, %v1313
    %v1322 = vadd.f32 %v1302, %v1314
    %v1323 = vadd.f32 %v1303, %v1315
    %v1324 = vadd.f32 %v1304, %v1316
    %v1325 = vperm.slane %v1101, 3
    %v1326 = vperm.slane %v1102, 3
    %v1327 = vperm.slane %v1103, 3
    %v1328 = vperm.slane %v1104, 3
    %v1329 = vmul.f32 %v551, %v1325
    %v1330 = vmul.f32 %v551, %v1326
    %v1331 = vmul.f32 %v551, %v1327
    %v1332 = vmul.f32 %v551, %v1328
    %v1333 = vmul.f32 %v555, %v1325
    %v1334 = vmul.f32 %v555, %v1326
    %v1335 = vmul.f32 %v555, %v1327
    %v1336 = vmul.f32 %v555, %v1328
    %v1337 = vadd.f32 %v1317, %v1329
    %v1338 = vadd.f32 %v1318, %v1330
    %v1339 = vadd.f32 %v1319, %v1331
    %v1340 = vadd.f32 %v1320, %v1332
    %v1341 = vadd.f32 %v1321, %v1333
    %v1342 = vadd.f32 %v1322, %v1334
    %v1343 = vadd.f32 %v1323, %v1335
    %v1344 = vadd.f32 %v1324, %v1336
    %v1345 = vperm.slane %v1101, 4
    %v1346 = vperm.slane %v1102, 4
    %v1347 = vperm.slane %v1103, 4
    %v1348 = vperm.slane %v1104, 4
    %v1349 = vmul.f32 %v579, %v1345
    %v1350 = vmul.f32 %v579, %v1346
    %v1351 = vmul.f32 %v579, %v1347
    %v1352 = vmul.f32 %v579, %v1348
    %v1353 = vmul.f32 %v583, %v1345
    %v1354 = vmul.f32 %v583, %v1346
    %v1355 = vmul.f32 %v583, %v1347
    %v1356 = vmul.f32 %v583, %v1348
    %v1357 = vadd.f32 %v1337, %v1349
    %v1358 = vadd.f32 %v1338, %v1350
    %v1359 = vadd.f32 %v1339, %v1351
    %v1360 = vadd.f32 %v1340, %v1352
    %v1361 = vadd.f32 %v1341, %v1353
    %v1362 = vadd.f32 %v1342, %v1354
    %v1363 = vadd.f32 %v1343, %v1355
    %v1364 = vadd.f32 %v1344, %v1356
    %v1365 = vperm.slane %v1101, 5
    %v1366 = vperm.slane %v1102, 5
    %v1367 = vperm.slane %v1103, 5
    %v1368 = vperm.slane %v1104, 5
    %v1369 = vmul.f32 %v607, %v1365
    %v1370 = vmul.f32 %v607, %v1366
    %v1371 = vmul.f32 %v607, %v1367
    %v1372 = vmul.f32 %v607, %v1368
    %v1373 = vmul.f32 %v611, %v1365
    %v1374 = vmul.f32 %v611, %v1366
    %v1375 = vmul.f32 %v611, %v1367
    %v1376 = vmul.f32 %v611, %v1368
    %v1377 = vadd.f32 %v1357, %v1369
    %v1378 = vadd.f32 %v1358, %v1370
    %v1379 = vadd.f32 %v1359, %v1371
    %v1380 = vadd.f32 %v1360, %v1372
    %v1381 = vadd.f32 %v1361, %v1373
    %v1382 = vadd.f32 %v1362, %v1374
    %v1383 = vadd.f32 %v1363, %v1375
    %v1384 = vadd.f32 %v1364, %v1376
    %v1385 = vperm.slane %v1101, 6
    %v1386 = vperm.slane %v1102, 6
    %v1387 = vperm.slane %v1103, 6
    %v1388 = vperm.slane %v1104, 6
    %v1389 = vmul.f32 %v635, %v1385
    %v1390 = vmul.f32 %v635, %v1386
    %v1391 = vmul.f32 %v635, %v1387
    %v1392 = vmul.f32 %v635, %v1388
    %v1393 = vmul.f32 %v639, %v1385
    %v1394 = vmul.f32 %v639, %v1386
    %v1395 = vmul.f32 %v639, %v1387
    %v1396 = vmul.f32 %v639, %v1388
    %v1397 = vadd.f32 %v1377, %v1389
    %v1398 = vadd.f32 %v1378, %v1390
    %v1399 = vadd.f32 %v1379, %v1391
    %v1400 = vadd.f32 %v1380, %v1392
    %v1401 = vadd.f32 %v1381, %v1393
    %v1402 = vadd.f32 %v1382, %v1394
    %v1403 = vadd.f32 %v1383, %v1395
    %v1404 = vadd.f32 %v1384, %v1396
    %v1405 = vperm.slane %v1101, 7
    %v1406 = vperm.slane %v1102, 7
    %v1407 = vperm.slane %v1103, 7
    %v1408 = vperm.slane %v1104, 7
    %v1409 = vmul.f32 %v663, %v1405
    %v1410 = vmul.f32 %v663, %v1406
    %v1411 = vmul.f32 %v663, %v1407
    %v1412 = vmul.f32 %v663, %v1408
    %v1413 = vmul.f32 %v667, %v1405
    %v1414 = vmul.f32 %v667, %v1406
    %v1415 = vmul.f32 %v667, %v1407
    %v1416 = vmul.f32 %v667, %v1408
    %v1417 = vadd.f32 %v1397, %v1409
    %v1418 = vadd.f32 %v1398, %v1410
    %v1419 = vadd.f32 %v1399, %v1411
    %v1420 = vadd.f32 %v1400, %v1412
    %v1421 = vadd.f32 %v1401, %v1413
    %v1422 = vadd.f32 %v1402, %v1414
    %v1423 = vadd.f32 %v1403, %v1415
    %v1424 = vadd.f32 %v1404, %v1416
    %v1425 = vmax.f32 %v1417, 0.0
    %v1426 = vmax.f32 %v1418, 0.0
    %v1427 = vmax.f32 %v1419, 0.0
    %v1428 = vmax.f32 %v1420, 0.0
    %v1429 = vmax.f32 %v1421, 0.0
    %v1430 = vmax.f32 %v1422, 0.0
    %v1431 = vmax.f32 %v1423, 0.0
    %v1432 = vmax.f32 %v1424, 0.0
    %v1433 = vperm.slane %v1425, 0
    %v1434 = vperm.slane %v1426, 0
    %v1435 = vperm.slane %v1427, 0
    %v1436 = vperm.slane %v1428, 0
    %v1437 = vmul.f32 %v700, %v1433
    %v1438 = vmul.f32 %v700, %v1434
    %v1439 = vmul.f32 %v700, %v1435
    %v1440 = vmul.f32 %v700, %v1436
    %v1441 = vadd.f32 %v1437, %v713
    %v1442 = vadd.f32 %v1438, %v713
    %v1443 = vadd.f32 %v1439, %v713
    %v1444 = vadd.f32 %v1440, %v713
    %v1445 = vperm.slane %v1425, 1
    %v1446 = vperm.slane %v1426, 1
    %v1447 = vperm.slane %v1427, 1
    %v1448 = vperm.slane %v1428, 1
    %v1449 = vmul.f32 %v721, %v1445
    %v1450 = vmul.f32 %v721, %v1446
    %v1451 = vmul.f32 %v721, %v1447
    %v1452 = vmul.f32 %v721, %v1448
    %v1453 = vadd.f32 %v1441, %v1449
    %v1454 = vadd.f32 %v1442, %v1450
    %v1455 = vadd.f32 %v1443, %v1451
    %v1456 = vadd.f32 %v1444, %v1452
    %v1457 = vperm.slane %v1425, 2
    %v1458 = vperm.slane %v1426, 2
    %v1459 = vperm.slane %v1427, 2
    %v1460 = vperm.slane %v1428, 2
    %v1461 = vmul.f32 %v737, %v1457
    %v1462 = vmul.f32 %v737, %v1458
    %v1463 = vmul.f32 %v737, %v1459
    %v1464 = vmul.f32 %v737, %v1460
    %v1465 = vadd.f32 %v1453, %v1461
    %v1466 = vadd.f32 %v1454, %v1462
    %v1467 = vadd.f32 %v1455, %v1463
    %v1468 = vadd.f32 %v1456, %v1464
    %v1469 = vperm.slane %v1425, 3
    %v1470 = vperm.slane %v1426, 3
    %v1471 = vperm.slane %v1427, 3
    %v1472 = vperm.slane %v1428, 3
    %v1473 = vmul.f32 %v753, %v1469
    %v1474 = vmul.f32 %v753, %v1470
    %v1475 = vmul.f32 %v753, %v1471
    %v1476 = vmul.f32 %v753, %v1472
    %v1477 = vadd.f32 %v1465, %v1473
    %v1478 = vadd.f32 %v1466, %v1474
    %v1479 = vadd.f32 %v1467, %v1475
    %v1480 = vadd.f32 %v1468, %v1476
    %v1481 = vperm.slane %v1425, 4
    %v1482 = vperm.slane %v1426, 4
    %v1483 = vperm.slane %v1427, 4
    %v1484 = vperm.slane %v1428, 4
    %v1485 = vmul.f32 %v769, %v1481
    %v1486 = vmul.f32 %v769, %v1482
    %v1487 = vmul.f32 %v769, %v1483
    %v1488 = vmul.f32 %v769, %v1484
    %v1489 = vadd.f32 %v1477, %v1485
    %v1490 = vadd.f32 %v1478, %v1486
    %v1491 = vadd.f32 %v1479, %v1487
    %v1492 = vadd.f32 %v1480, %v1488
    %v1493 = vperm.slane %v1425, 5
    %v1494 = vperm.slane %v1426, 5
    %v1495 = vperm.slane %v1427, 5
    %v1496 = vperm.slane %v1428, 5
    %v1497 = vmul.f32 %v785, %v1493
    %v1498 = vmul.f32 %v785, %v1494
    %v1499 = vmul.f32 %v785, %v1495
    %v1500 = vmul.f32 %v785, %v1496
    %v1501 = vadd.f32 %v1489, %v1497
    %v1502 = vadd.f32 %v1490, %v1498
    %v1503 = vadd.f32 %v1491, %v1499
    %v1504 = vadd.f32 %v1492, %v1500
    %v1505 = vperm.slane %v1425, 6
    %v1506 = vperm.slane %v1426, 6
    %v1507 = vperm.slane %v1427, 6
    %v1508 = vperm.slane %v1428, 6
    %v1509 = vmul.f32 %v801, %v1505
    %v1510 = vmul.f32 %v801, %v1506
    %v1511 = vmul.f32 %v801, %v1507
    %v1512 = vmul.f32 %v801, %v1508
    %v1513 = vadd.f32 %v1501, %v1509
    %v1514 = vadd.f32 %v1502, %v1510
    %v1515 = vadd.f32 %v1503, %v1511
    %v1516 = vadd.f32 %v1504, %v1512
    %v1517 = vperm.slane %v1425, 7
    %v1518 = vperm.slane %v1426, 7
    %v1519 = vperm.slane %v1427, 7
    %v1520 = vperm.slane %v1428, 7
    %v1521 = vmul.f32 %v817, %v1517
    %v1522 = vmul.f32 %v817, %v1518
    %v1523 = vmul.f32 %v817, %v1519
    %v1524 = vmul.f32 %v817, %v1520
    %v1525 = vadd.f32 %v1513, %v1521
    %v1526 = vadd.f32 %v1514, %v1522
    %v1527 = vadd.f32 %v1515, %v1523
    %v1528 = vadd.f32 %v1516, %v1524
    %v1529 = vperm.slane %v1429, 0
    %v1530 = vperm.slane %v1430, 0
    %v1531 = vperm.slane %v1431, 0
    %v1532 = vperm.slane %v1432, 0
    %v1533 = vmul.f32 %v833, %v1529
    %v1534 = vmul.f32 %v833, %v1530
    %v1535 = vmul.f32 %v833, %v1531
    %v1536 = vmul.f32 %v833, %v1532
    %v1537 = vadd.f32 %v1525, %v1533
    %v1538 = vadd.f32 %v1526, %v1534
    %v1539 = vadd.f32 %v1527, %v1535
    %v1540 = vadd.f32 %v1528, %v1536
    %v1541 = vperm.slane %v1429, 1
    %v1542 = vperm.slane %v1430, 1
    %v1543 = vperm.slane %v1431, 1
    %v1544 = vperm.slane %v1432, 1
    %v1545 = vmul.f32 %v849, %v1541
    %v1546 = vmul.f32 %v849, %v1542
    %v1547 = vmul.f32 %v849, %v1543
    %v1548 = vmul.f32 %v849, %v1544
    %v1549 = vadd.f32 %v1537, %v1545
    %v1550 = vadd.f32 %v1538, %v1546
    %v1551 = vadd.f32 %v1539, %v1547
    %v1552 = vadd.f32 %v1540, %v1548
    %v1553 = vperm.slane %v1429, 2
    %v1554 = vperm.slane %v1430, 2
    %v1555 = vperm.slane %v1431, 2
    %v1556 = vperm.slane %v1432, 2
    %v1557 = vmul.f32 %v865, %v1553
    %v1558 = vmul.f32 %v865, %v1554
    %v1559 = vmul.f32 %v865, %v1555
    %v1560 = vmul.f32 %v865, %v1556
    %v1561 = vadd.f32 %v1549, %v1557
    %v1562 = vadd.f32 %v1550, %v1558
    %v1563 = vadd.f32 %v1551, %v1559
    %v1564 = vadd.f32 %v1552, %v1560
    %v1565 = vperm.slane %v1429, 3
    %v1566 = vperm.slane %v1430, 3
    %v1567 = vperm.slane %v1431, 3
    %v1568 = vperm.slane %v1432, 3
    %v1569 = vmul.f32 %v881, %v1565
    %v1570 = vmul.f32 %v881, %v1566
    %v1571 = vmul.f32 %v881, %v1567
    %v1572 = vmul.f32 %v881, %v1568
    %v1573 = vadd.f32 %v1561, %v1569
    %v1574 = vadd.f32 %v1562, %v1570
    %v1575 = vadd.f32 %v1563, %v1571
    %v1576 = vadd.f32 %v1564, %v1572
    %v1577 = vperm.slane %v1429, 4
    %v1578 = vperm.slane %v1430, 4
    %v1579 = vperm.slane %v1431, 4
    %v1580 = vperm.slane %v1432, 4
    %v1581 = vmul.f32 %v897, %v1577
    %v1582 = vmul.f32 %v897, %v1578
    %v1583 = vmul.f32 %v897, %v1579
    %v1584 = vmul.f32 %v897, %v1580
    %v1585 = vadd.f32 %v1573, %v1581
    %v1586 = vadd.f32 %v1574, %v1582
    %v1587 = vadd.f32 %v1575, %v1583
    %v1588 = vadd.f32 %v1576, %v1584
    %v1589 = vperm.slane %v1429, 5
    %v1590 = vperm.slane %v1430, 5
    %v1591 = vperm.slane %v1431, 5
    %v1592 = vperm.slane %v1432, 5
    %v1593 = vmul.f32 %v913, %v1589
    %v1594 = vmul.f32 %v913, %v1590
    %v1595 = vmul.f32 %v913, %v1591
    %v1596 = vmul.f32 %v913, %v1592
    %v1597 = vadd.f32 %v1585, %v1593
    %v1598 = vadd.f32 %v1586, %v1594
    %v1599 = vadd.f32 %v1587, %v1595
    %v1600 = vadd.f32 %v1588, %v1596
    %v1601 = vperm.slane %v1429, 6
    %v1602 = vperm.slane %v1430, 6
    %v1603 = vperm.slane %v1431, 6
    %v1604 = vperm.slane %v1432, 6
    %v1605 = vmul.f32 %v929, %v1601
    %v1606 = vmul.f32 %v929, %v1602
    %v1607 = vmul.f32 %v929, %v1603
    %v1608 = vmul.f32 %v929, %v1604
    %v1609 = vadd.f32 %v1597, %v1605
    %v1610 = vadd.f32 %v1598, %v1606
    %v1611 = vadd.f32 %v1599, %v1607
    %v1612 = vadd.f32 %v1600, %v1608
    %v1613 = vperm.slane %v1429, 7
    %v1614 = vperm.slane %v1430, 7
    %v1615 = vperm.slane %v1431, 7
    %v1616 = vperm.slane %v1432, 7
    %v1617 = vmul.f32 %v945, %v1613
    %v1618 = vmul.f32 %v945, %v1614
    %v1619 = vmul.f32 %v945, %v1615
    %v1620 = vmul.f32 %v945, %v1616
    %v1621 = vadd.f32 %v1609, %v1617
    %v1622 = vadd.f32 %v1610, %v1618
    %v1623 = vadd.f32 %v1611, %v1619
    %v1624 = vadd.f32 %v1612, %v1620
    %v1629 = vrot.slane %v1622, 4
    %v1630 = vrot.slane %v1624, 4
    %v1631 = vsel %vm965, %v1621, %v1629
    %v1632 = vsel %vm965, %v1623, %v1630
    %s1635 = scalar_lea.vmem [#allocation2], 16
    %1636 = vst [vmem:[%s1635] sm:$0xff] %v1631
    %1637 = vst [vmem:[%s1635 + $0x8] sm:$0xff] %v1632
    // Predicated region
    $region30: #{mlp_forward_t.1} parent=1 // pred_check
      _
    $region31: #{mlp_forward_t.1} parent=1 // pred_check_branch
      %1639 = sbr.rel (0) target = $region33
    $region32: #{mlp_forward_t.1} parent=1 // pred_region
      %1641 = vsyncadd [#allocation3], 0
      %s1643 = sshll.u32 [#allocation2], 4
      %s1644 = int_to_ptr.vmem [resolvable:$true] %s1643
      %s1645 = sshll.u32 %s7, 4
      %s1646 = int_to_ptr.hbm [resolvable:$true] %s1645
      %1648 = dma.vmem_to_hbm [thread:$0]  %s1644, 512, %s1646, [#allocation3]
    $region33: #{mlp_forward_t.1} parent=1 // pred_fallthru
      _
    // Predicated region
    $region34: #{mlp_forward_t.1} parent=1 // pred_check
      _
    $region35: #{mlp_forward_t.1} parent=1 // pred_check_branch
      %1650 = sbr.rel (0) target = $region37
    $region36: #{mlp_forward_t.1} parent=1 // pred_region
      %1652 = dma.done [#allocation3], 512
    $region37: #{mlp_forward_t.1} parent=1 // pred_fallthru
      _
    %1653 = vsyncpa [#allocation3], 1

</llo_original>
